<compile_context>
chip_gen: v5e
topology: v5e:2x2
jax: 0.10.0
libtpu: 0.0.40
codegen_flags: <defaults>
</compile_context>

<pallas_src>
import functools

import jax
import jax.numpy as jnp
from jax.experimental import pallas as pl
from jax.experimental.pallas import tpu as pltpu

NUM_CLASSES = 4            # -> K = 5 logits per query (last class = "no object")
EOS_COEF = 0.1
LOSS_W = (1.0, 1.0, 1.0)   # (ce, l1, giou)


def _criterion_kernel(logits_ref, boxes_ref, labels_ref, tbox_ref, out_ref, *, B, Q, T):
    # logits_ref : [B*Q, K] f32
    # boxes_ref  : [B*Q, 4] f32   predicted boxes, cxcywh
    # labels_ref : [1, N]  int32  target labels, n = b*T + t
    # tbox_ref   : [4, N]  f32    target boxes, cxcywh, lane-dense
    logits = logits_ref[...]
    boxes = boxes_ref[...]
    labels = labels_ref[...]
    tb = tbox_ref[...]
    BQ, K = logits.shape
    N = B * T
    NO_OBJ = K - 1

    # ---- shared softmax pieces (reused by matcher cost AND weighted CE) --------
    mx = jnp.max(logits, axis=1, keepdims=True)          # [BQ,1]
    z = logits - mx
    e = jnp.exp(z)
    se = jnp.sum(e, axis=1, keepdims=True)                # [BQ,1] (single K-reduce)
    logp = z - jnp.log(se)                                # [BQ,K]
    prob = e / se                                         # [BQ,K]

    # ---- matcher: greedy unique assignment, fully fused in-kernel --------------
    # TODO(synk): exact Hungarian assignment (scipy linear_sum_assignment) has no
    # clean Pallas equivalent; a greedy unique-assignment matcher stands in for
    # the injected `matcher` module (cost = -prob[label] + L1(box, tbox)).
    lane_n = jax.lax.broadcasted_iota(jnp.int32, (1, N), 1)
    row_q = jax.lax.broadcasted_iota(jnp.int32, (Q, 1), 0)
    row_q_f = row_q.astype(jnp.float32)
    labels_f = labels.astype(jnp.float32)                 # [1,N]
    qidx = jnp.zeros((1, N), jnp.int32)                   # matched flat query idx
    BIG = jnp.float32(1e30)
    for b in range(B):
        prob_b = prob[b * Q:(b + 1) * Q, :]               # [Q,K]
        box_b = boxes[b * Q:(b + 1) * Q, :]               # [Q,4]
        lab_b = labels_f[:, b * T:(b + 1) * T]            # [1,T]
        tb_b = tb[:, b * T:(b + 1) * T]                   # [4,T]

        cost = jnp.zeros((Q, T), jnp.float32)
        for k in range(K):                                # class cost: -prob[q, label_t]
            cost = cost - jnp.where(lab_b == k, prob_b[:, k:k + 1], 0.0)
        for c in range(4):                                # L1 cost
            cost = cost + jnp.abs(box_b[:, c:c + 1] - tb_b[c:c + 1, :])

        used = jnp.zeros((Q, 1), jnp.float32)
        for t in range(T):
            col = jnp.where(used > 0.0, BIG, cost[:, t:t + 1])        # [Q,1]
            mval = jnp.min(col)                                       # scalar
            q_f = jnp.min(jnp.where(col == mval, row_q_f, jnp.float32(Q)))
            q_i = q_f.astype(jnp.int32)                               # argmin (first tie)
            used = jnp.where(row_q == q_i, 1.0, used)
            qidx = jnp.where(lane_n == (b * T + t), q_i + b * Q, qidx)

    # ---- fused "scatter": per-query target class via iota compare --------------
    row_iota = jax.lax.broadcasted_iota(jnp.int32, (BQ, N), 0)
    match = row_iota == qidx                                          # [BQ,N]
    matched_label_f = jnp.max(
        jnp.where(match, labels_f, -1.0), axis=1, keepdims=True)      # [BQ,1]
    tcls = jnp.where(matched_label_f >= 0.0,
                     matched_label_f.astype(jnp.int32), NO_OBJ)       # [BQ,1]

    # ---- weighted cross entropy (F.cross_entropy, weight=empty_weight, 'mean') --
    cls_iota = jax.lax.broadcasted_iota(jnp.int32, (BQ, K), 1)
    onehot = cls_iota == tcls                                         # [BQ,K]
    nll = -jnp.sum(jnp.where(onehot, logp, 0.0), axis=1, keepdims=True)  # [BQ,1]
    w_ce = jnp.where(tcls == NO_OBJ, EOS_COEF, 1.0)                      # [BQ,1]
    loss_ce = jnp.sum(nll * w_ce) / jnp.sum(w_ce)

    # ---- fused "gather": matched predicted boxes, per-component [1, N] rows ----
    sel = match.astype(jnp.float32)                                   # [BQ,N]

    def gather_comp(c):
        return jnp.sum(boxes[:, c:c + 1] * sel, axis=0, keepdims=True)  # [1,N]

    s_cx, s_cy, s_w, s_h = [gather_comp(c) for c in range(4)]
    t_cx, t_cy, t_w, t_h = tb[0:1, :], tb[1:2, :], tb[2:3, :], tb[3:4, :]

    # ---- L1 loss (F.l1_loss 'mean': mean over all 4*N elements) ----------------
    l1_sum = (jnp.sum(jnp.abs(s_cx - t_cx)) + jnp.sum(jnp.abs(s_cy - t_cy)) +
              jnp.sum(jnp.abs(s_w - t_w)) + jnp.sum(jnp.abs(s_h - t_h)))
    loss_l1 = l1_sum / (4.0 * N)

    # ---- GIoU loss (cxcywh -> xyxy in-kernel, 'mean' over N) -------------------
    sx1, sy1 = s_cx - 0.5 * s_w, s_cy - 0.5 * s_h
    sx2, sy2 = s_cx + 0.5 * s_w, s_cy + 0.5 * s_h
    tx1, ty1 = t_cx - 0.5 * t_w, t_cy - 0.5 * t_h
    tx2, ty2 = t_cx + 0.5 * t_w, t_cy + 0.5 * t_h
    eps = 1e-7
    area_s = (sx2 - sx1) * (sy2 - sy1)
    area_t = (tx2 - tx1) * (ty2 - ty1)
    ix1 = jnp.maximum(sx1, tx1)
    iy1 = jnp.maximum(sy1, ty1)
    ix2 = jnp.minimum(sx2, tx2)
    iy2 = jnp.minimum(sy2, ty2)
    inter = jnp.maximum(ix2 - ix1, 0.0) * jnp.maximum(iy2 - iy1, 0.0)
    union = area_s + area_t - inter
    iou = inter / (union + eps)
    cx1 = jnp.minimum(sx1, tx1)
    cy1 = jnp.minimum(sy1, ty1)
    cx2 = jnp.maximum(sx2, tx2)
    cy2 = jnp.maximum(sy2, ty2)
    area_c = (cx2 - cx1) * (cy2 - cy1)
    giou = iou - (area_c - union) / (area_c + eps)
    loss_giou = jnp.mean(1.0 - giou)

    total = LOSS_W[0] * loss_ce + LOSS_W[1] * loss_l1 + LOSS_W[2] * loss_giou
    out_ref[...] = jnp.reshape(total, (1, 1))


@jax.jit
def set_criterion_forward(logits, boxes, tgt_labels, tgt_boxes):
    """Entire SetCriterion forward (matcher + losses) as a single Pallas kernel."""
    B, Q, K = logits.shape
    T = tgt_labels.shape[1]
    N = B * T
    assert T <= Q, "greedy unique assignment requires T <= Q"

    logits2d = logits.astype(jnp.float32).reshape(B * Q, K)     # [B*Q, K]
    boxes2d = boxes.astype(jnp.float32).reshape(B * Q, 4)       # [B*Q, 4]
    labels2d = tgt_labels.astype(jnp.int32).reshape(1, N)       # [1, N]
    tboxes_t = tgt_boxes.astype(jnp.float32).reshape(N, 4).T    # [4, N]

    vmem = pl.BlockSpec(memory_space=pltpu.MemorySpace.VMEM)
    kernel = functools.partial(_criterion_kernel, B=B, Q=Q, T=T)
    out = pl.pallas_call(
        kernel,
        out_shape=jax.ShapeDtypeStruct((1, 1), jnp.float32),
        in_specs=[vmem, vmem, vmem, vmem],
        out_specs=vmem,
    )(logits2d, boxes2d, labels2d, tboxes_t)
    return out[0, 0]


if __name__ == "__main__":
    key = jax.random.PRNGKey(0)
    B, Q, T = 2, 8, 3
    K = NUM_CLASSES + 1

    k1, k2, k3, k4 = jax.random.split(key, 4)
    outputs_logits = jax.random.normal(k1, (B, Q, K), dtype=jnp.float32)
    outputs_boxes = jax.random.uniform(k2, (B, Q, 4), dtype=jnp.float32,
                                       minval=0.05, maxval=0.95)
    tgt_labels = jax.random.randint(k3, (B, T), 0, NUM_CLASSES, dtype=jnp.int32)
    tgt_boxes = jax.random.uniform(k4, (B, T, 4), dtype=jnp.float32,
                                   minval=0.05, maxval=0.95)

    loss = set_criterion_forward(outputs_logits, outputs_boxes, tgt_labels, tgt_boxes)
    jax.block_until_ready(loss)
    assert jnp.isfinite(loss)
    print("KERNEL_OK")
</pallas_src>

<mosaic_0001>
module attributes {stable_mosaic.version = 11 : i64} {
  func.func @_criterion_kernel(%arg0: memref<16x5xf32, #tpu.memory_space<vmem>>, %arg1: memref<16x4xf32, #tpu.memory_space<vmem>>, %arg2: memref<1x6xi32, #tpu.memory_space<vmem>>, %arg3: memref<4x6xf32, #tpu.memory_space<vmem>>, %arg4: memref<1x1xf32, #tpu.memory_space<vmem>>) attributes {dimension_semantics = [], scalar_prefetch = 0 : i64, scratch_operands = 0 : i64, tpu.core_type = #tpu.core_type<tc>} {
    %c0 = arith.constant 0 : index
    %c0_0 = arith.constant 0 : index
    %0 = vector.load %arg0[%c0, %c0_0] : memref<16x5xf32, #tpu.memory_space<vmem>>, vector<16x5xf32>
    %c0_1 = arith.constant 0 : index
    %c0_2 = arith.constant 0 : index
    %1 = vector.load %arg1[%c0_1, %c0_2] : memref<16x4xf32, #tpu.memory_space<vmem>>, vector<16x4xf32>
    %c0_3 = arith.constant 0 : index
    %c0_4 = arith.constant 0 : index
    %2 = vector.load %arg2[%c0_3, %c0_4] : memref<1x6xi32, #tpu.memory_space<vmem>>, vector<1x6xi32>
    %c0_5 = arith.constant 0 : index
    %c0_6 = arith.constant 0 : index
    %3 = vector.load %arg3[%c0_5, %c0_6] : memref<4x6xf32, #tpu.memory_space<vmem>>, vector<4x6xf32>
    %cst = arith.constant dense<0xFF800000> : vector<16xf32>
    %4 = vector.multi_reduction <maximumf>, %0, %cst [1] : vector<16x5xf32> to vector<16xf32>
    %5 = vector.shape_cast %4 : vector<16xf32> to vector<16x1xf32>
    %6 = vector.broadcast %5 : vector<16x1xf32> to vector<16x5xf32>
    %7 = arith.subf %0, %6 : vector<16x5xf32>
    %8 = math.exp %7 : vector<16x5xf32>
    %cst_7 = arith.constant dense<0.000000e+00> : vector<16xf32>
    %9 = vector.multi_reduction <add>, %8, %cst_7 [1] : vector<16x5xf32> to vector<16xf32>
    %10 = vector.shape_cast %9 : vector<16xf32> to vector<16x1xf32>
    %11 = math.log %10 : vector<16x1xf32>
    %12 = vector.broadcast %11 : vector<16x1xf32> to vector<16x5xf32>
    %13 = arith.subf %7, %12 : vector<16x5xf32>
    %14 = vector.broadcast %10 : vector<16x1xf32> to vector<16x5xf32>
    %15 = arith.divf %8, %14 : vector<16x5xf32>
    %16 = tpu.iota {dimensions = array<i32: 1>} : vector<1x6xi32>
    %17 = tpu.iota {dimensions = array<i32: 0>} : vector<8x1xi32>
    %18 = arith.sitofp %17 : vector<8x1xi32> to vector<8x1xf32>
    %19 = arith.sitofp %2 : vector<1x6xi32> to vector<1x6xf32>
    %c0_i32 = arith.constant 0 : i32
    %20 = vector.broadcast %c0_i32 : i32 to vector<1x6xi32>
    %21 = vector.extract_strided_slice %15 {offsets = [0, 0], sizes = [8, 5], strides = [1, 1]} : vector<16x5xf32> to vector<8x5xf32>
    %22 = vector.extract_strided_slice %1 {offsets = [0, 0], sizes = [8, 4], strides = [1, 1]} : vector<16x4xf32> to vector<8x4xf32>
    %23 = vector.extract_strided_slice %19 {offsets = [0, 0], sizes = [1, 3], strides = [1, 1]} : vector<1x6xf32> to vector<1x3xf32>
    %24 = vector.extract_strided_slice %3 {offsets = [0, 0], sizes = [4, 3], strides = [1, 1]} : vector<4x6xf32> to vector<4x3xf32>
    %cst_8 = arith.constant 0.000000e+00 : f32
    %25 = vector.broadcast %cst_8 : f32 to vector<8x3xf32>
    %cst_9 = arith.constant 0.000000e+00 : f32
    %26 = vector.broadcast %cst_9 : f32 to vector<1x3xf32>
    %27 = arith.cmpf oeq, %23, %26 : vector<1x3xf32>
    %28 = vector.extract_strided_slice %21 {offsets = [0, 0], sizes = [8, 1], strides = [1, 1]} : vector<8x5xf32> to vector<8x1xf32>
    %cst_10 = arith.constant 0.000000e+00 : f32
    %29 = vector.shape_cast %27 : vector<1x3xi1> to vector<1x3xi1>
    %30 = vector.broadcast %29 : vector<1x3xi1> to vector<8x3xi1>
    %31 = vector.shape_cast %28 : vector<8x1xf32> to vector<8x1xf32>
    %32 = vector.broadcast %31 : vector<8x1xf32> to vector<8x3xf32>
    %33 = vector.broadcast %cst_10 : f32 to vector<8x3xf32>
    %34 = arith.select %30, %32, %33 : vector<8x3xi1>, vector<8x3xf32>
    %35 = arith.subf %25, %34 : vector<8x3xf32>
    %cst_11 = arith.constant 1.000000e+00 : f32
    %36 = vector.broadcast %cst_11 : f32 to vector<1x3xf32>
    %37 = arith.cmpf oeq, %23, %36 : vector<1x3xf32>
    %38 = vector.extract_strided_slice %21 {offsets = [0, 1], sizes = [8, 1], strides = [1, 1]} : vector<8x5xf32> to vector<8x1xf32>
    %cst_12 = arith.constant 0.000000e+00 : f32
    %39 = vector.shape_cast %37 : vector<1x3xi1> to vector<1x3xi1>
    %40 = vector.broadcast %39 : vector<1x3xi1> to vector<8x3xi1>
    %41 = vector.shape_cast %38 : vector<8x1xf32> to vector<8x1xf32>
    %42 = vector.broadcast %41 : vector<8x1xf32> to vector<8x3xf32>
    %43 = vector.broadcast %cst_12 : f32 to vector<8x3xf32>
    %44 = arith.select %40, %42, %43 : vector<8x3xi1>, vector<8x3xf32>
    %45 = arith.subf %35, %44 : vector<8x3xf32>
    %cst_13 = arith.constant 2.000000e+00 : f32
    %46 = vector.broadcast %cst_13 : f32 to vector<1x3xf32>
    %47 = arith.cmpf oeq, %23, %46 : vector<1x3xf32>
    %48 = vector.extract_strided_slice %21 {offsets = [0, 2], sizes = [8, 1], strides = [1, 1]} : vector<8x5xf32> to vector<8x1xf32>
    %cst_14 = arith.constant 0.000000e+00 : f32
    %49 = vector.shape_cast %47 : vector<1x3xi1> to vector<1x3xi1>
    %50 = vector.broadcast %49 : vector<1x3xi1> to vector<8x3xi1>
    %51 = vector.shape_cast %48 : vector<8x1xf32> to vector<8x1xf32>
    %52 = vector.broadcast %51 : vector<8x1xf32> to vector<8x3xf32>
    %53 = vector.broadcast %cst_14 : f32 to vector<8x3xf32>
    %54 = arith.select %50, %52, %53 : vector<8x3xi1>, vector<8x3xf32>
    %55 = arith.subf %45, %54 : vector<8x3xf32>
    %cst_15 = arith.constant 3.000000e+00 : f32
    %56 = vector.broadcast %cst_15 : f32 to vector<1x3xf32>
    %57 = arith.cmpf oeq, %23, %56 : vector<1x3xf32>
    %58 = vector.extract_strided_slice %21 {offsets = [0, 3], sizes = [8, 1], strides = [1, 1]} : vector<8x5xf32> to vector<8x1xf32>
    %cst_16 = arith.constant 0.000000e+00 : f32
    %59 = vector.shape_cast %57 : vector<1x3xi1> to vector<1x3xi1>
    %60 = vector.broadcast %59 : vector<1x3xi1> to vector<8x3xi1>
    %61 = vector.shape_cast %58 : vector<8x1xf32> to vector<8x1xf32>
    %62 = vector.broadcast %61 : vector<8x1xf32> to vector<8x3xf32>
    %63 = vector.broadcast %cst_16 : f32 to vector<8x3xf32>
    %64 = arith.select %60, %62, %63 : vector<8x3xi1>, vector<8x3xf32>
    %65 = arith.subf %55, %64 : vector<8x3xf32>
    %cst_17 = arith.constant 4.000000e+00 : f32
    %66 = vector.broadcast %cst_17 : f32 to vector<1x3xf32>
    %67 = arith.cmpf oeq, %23, %66 : vector<1x3xf32>
    %68 = vector.extract_strided_slice %21 {offsets = [0, 4], sizes = [8, 1], strides = [1, 1]} : vector<8x5xf32> to vector<8x1xf32>
    %cst_18 = arith.constant 0.000000e+00 : f32
    %69 = vector.shape_cast %67 : vector<1x3xi1> to vector<1x3xi1>
    %70 = vector.broadcast %69 : vector<1x3xi1> to vector<8x3xi1>
    %71 = vector.shape_cast %68 : vector<8x1xf32> to vector<8x1xf32>
    %72 = vector.broadcast %71 : vector<8x1xf32> to vector<8x3xf32>
    %73 = vector.broadcast %cst_18 : f32 to vector<8x3xf32>
    %74 = arith.select %70, %72, %73 : vector<8x3xi1>, vector<8x3xf32>
    %75 = arith.subf %65, %74 : vector<8x3xf32>
    %76 = vector.extract_strided_slice %22 {offsets = [0, 0], sizes = [8, 1], strides = [1, 1]} : vector<8x4xf32> to vector<8x1xf32>
    %77 = vector.extract_strided_slice %24 {offsets = [0, 0], sizes = [1, 3], strides = [1, 1]} : vector<4x3xf32> to vector<1x3xf32>
    %78 = vector.broadcast %76 : vector<8x1xf32> to vector<8x3xf32>
    %79 = vector.broadcast %77 : vector<1x3xf32> to vector<8x3xf32>
    %80 = arith.subf %78, %79 : vector<8x3xf32>
    %81 = math.absf %80 : vector<8x3xf32>
    %82 = arith.addf %75, %81 : vector<8x3xf32>
    %83 = vector.extract_strided_slice %22 {offsets = [0, 1], sizes = [8, 1], strides = [1, 1]} : vector<8x4xf32> to vector<8x1xf32>
    %84 = vector.extract_strided_slice %24 {offsets = [1, 0], sizes = [1, 3], strides = [1, 1]} : vector<4x3xf32> to vector<1x3xf32>
    %85 = vector.broadcast %83 : vector<8x1xf32> to vector<8x3xf32>
    %86 = vector.broadcast %84 : vector<1x3xf32> to vector<8x3xf32>
    %87 = arith.subf %85, %86 : vector<8x3xf32>
    %88 = math.absf %87 : vector<8x3xf32>
    %89 = arith.addf %82, %88 : vector<8x3xf32>
    %90 = vector.extract_strided_slice %22 {offsets = [0, 2], sizes = [8, 1], strides = [1, 1]} : vector<8x4xf32> to vector<8x1xf32>
    %91 = vector.extract_strided_slice %24 {offsets = [2, 0], sizes = [1, 3], strides = [1, 1]} : vector<4x3xf32> to vector<1x3xf32>
    %92 = vector.broadcast %90 : vector<8x1xf32> to vector<8x3xf32>
    %93 = vector.broadcast %91 : vector<1x3xf32> to vector<8x3xf32>
    %94 = arith.subf %92, %93 : vector<8x3xf32>
    %95 = math.absf %94 : vector<8x3xf32>
    %96 = arith.addf %89, %95 : vector<8x3xf32>
    %97 = vector.extract_strided_slice %22 {offsets = [0, 3], sizes = [8, 1], strides = [1, 1]} : vector<8x4xf32> to vector<8x1xf32>
    %98 = vector.extract_strided_slice %24 {offsets = [3, 0], sizes = [1, 3], strides = [1, 1]} : vector<4x3xf32> to vector<1x3xf32>
    %99 = vector.broadcast %97 : vector<8x1xf32> to vector<8x3xf32>
    %100 = vector.broadcast %98 : vector<1x3xf32> to vector<8x3xf32>
    %101 = arith.subf %99, %100 : vector<8x3xf32>
    %102 = math.absf %101 : vector<8x3xf32>
    %103 = arith.addf %96, %102 : vector<8x3xf32>
    %cst_19 = arith.constant 0.000000e+00 : f32
    %104 = vector.broadcast %cst_19 : f32 to vector<8x1xf32>
    %cst_20 = arith.constant 0.000000e+00 : f32
    %105 = vector.broadcast %cst_20 : f32 to vector<8x1xf32>
    %106 = arith.cmpf ogt, %104, %105 : vector<8x1xf32>
    %107 = vector.extract_strided_slice %103 {offsets = [0, 0], sizes = [8, 1], strides = [1, 1]} : vector<8x3xf32> to vector<8x1xf32>
    %cst_21 = arith.constant 1.000000e+30 : f32
    %108 = vector.broadcast %cst_21 : f32 to vector<8x1xf32>
    %109 = arith.select %106, %108, %107 : vector<8x1xi1>, vector<8x1xf32>
    %110 = vector.shape_cast %109 : vector<8x1xf32> to vector<1x8x1xf32>
    %cst_22 = arith.constant dense<0x7F800000> : vector<1xf32>
    %111 = vector.multi_reduction <minimumf>, %110, %cst_22 [1, 2] : vector<1x8x1xf32> to vector<1xf32>
    %112 = vector.shape_cast %111 : vector<1xf32> to vector<1x1x1xf32>
    %113 = vector.extract %112[0, 0, 0] : f32 from vector<1x1x1xf32>
    %114 = vector.broadcast %113 : f32 to vector<8x1xf32>
    %115 = arith.cmpf oeq, %109, %114 : vector<8x1xf32>
    %cst_23 = arith.constant 8.000000e+00 : f32
    %116 = vector.broadcast %cst_23 : f32 to vector<8x1xf32>
    %117 = arith.select %115, %18, %116 : vector<8x1xi1>, vector<8x1xf32>
    %118 = vector.shape_cast %117 : vector<8x1xf32> to vector<1x8x1xf32>
    %cst_24 = arith.constant dense<0x7F800000> : vector<1xf32>
    %119 = vector.multi_reduction <minimumf>, %118, %cst_24 [1, 2] : vector<1x8x1xf32> to vector<1xf32>
    %120 = vector.shape_cast %119 : vector<1xf32> to vector<1x1x1xf32>
    %121 = vector.extract %120[0, 0, 0] : f32 from vector<1x1x1xf32>
    %122 = arith.fptosi %121 : f32 to i32
    %123 = vector.broadcast %122 : i32 to vector<8x1xi32>
    %124 = arith.cmpi eq, %17, %123 : vector<8x1xi32>
    %cst_25 = arith.constant 1.000000e+00 : f32
    %125 = vector.broadcast %cst_25 : f32 to vector<8x1xf32>
    %126 = arith.select %124, %125, %104 : vector<8x1xi1>, vector<8x1xf32>
    %c0_i32_26 = arith.constant 0 : i32
    %127 = vector.broadcast %c0_i32_26 : i32 to vector<1x6xi32>
    %128 = arith.cmpi eq, %16, %127 : vector<1x6xi32>
    %c0_i32_27 = arith.constant 0 : i32
    %129 = arith.addi %122, %c0_i32_27 : i32
    %130 = vector.broadcast %129 : i32 to vector<1x6xi32>
    %131 = arith.select %128, %130, %20 : vector<1x6xi1>, vector<1x6xi32>
    %cst_28 = arith.constant 0.000000e+00 : f32
    %132 = vector.broadcast %cst_28 : f32 to vector<8x1xf32>
    %133 = arith.cmpf ogt, %126, %132 : vector<8x1xf32>
    %134 = vector.extract_strided_slice %103 {offsets = [0, 1], sizes = [8, 1], strides = [1, 1]} : vector<8x3xf32> to vector<8x1xf32>
    %cst_29 = arith.constant 1.000000e+30 : f32
    %135 = vector.broadcast %cst_29 : f32 to vector<8x1xf32>
    %136 = arith.select %133, %135, %134 : vector<8x1xi1>, vector<8x1xf32>
    %137 = vector.shape_cast %136 : vector<8x1xf32> to vector<1x8x1xf32>
    %cst_30 = arith.constant dense<0x7F800000> : vector<1xf32>
    %138 = vector.multi_reduction <minimumf>, %137, %cst_30 [1, 2] : vector<1x8x1xf32> to vector<1xf32>
    %139 = vector.shape_cast %138 : vector<1xf32> to vector<1x1x1xf32>
    %140 = vector.extract %139[0, 0, 0] : f32 from vector<1x1x1xf32>
    %141 = vector.broadcast %140 : f32 to vector<8x1xf32>
    %142 = arith.cmpf oeq, %136, %141 : vector<8x1xf32>
    %cst_31 = arith.constant 8.000000e+00 : f32
    %143 = vector.broadcast %cst_31 : f32 to vector<8x1xf32>
    %144 = arith.select %142, %18, %143 : vector<8x1xi1>, vector<8x1xf32>
    %145 = vector.shape_cast %144 : vector<8x1xf32> to vector<1x8x1xf32>
    %cst_32 = arith.constant dense<0x7F800000> : vector<1xf32>
    %146 = vector.multi_reduction <minimumf>, %145, %cst_32 [1, 2] : vector<1x8x1xf32> to vector<1xf32>
    %147 = vector.shape_cast %146 : vector<1xf32> to vector<1x1x1xf32>
    %148 = vector.extract %147[0, 0, 0] : f32 from vector<1x1x1xf32>
    %149 = arith.fptosi %148 : f32 to i32
    %150 = vector.broadcast %149 : i32 to vector<8x1xi32>
    %151 = arith.cmpi eq, %17, %150 : vector<8x1xi32>
    %cst_33 = arith.constant 1.000000e+00 : f32
    %152 = vector.broadcast %cst_33 : f32 to vector<8x1xf32>
    %153 = arith.select %151, %152, %126 : vector<8x1xi1>, vector<8x1xf32>
    %c1_i32 = arith.constant 1 : i32
    %154 = vector.broadcast %c1_i32 : i32 to vector<1x6xi32>
    %155 = arith.cmpi eq, %16, %154 : vector<1x6xi32>
    %c0_i32_34 = arith.constant 0 : i32
    %156 = arith.addi %149, %c0_i32_34 : i32
    %157 = vector.broadcast %156 : i32 to vector<1x6xi32>
    %158 = arith.select %155, %157, %131 : vector<1x6xi1>, vector<1x6xi32>
    %cst_35 = arith.constant 0.000000e+00 : f32
    %159 = vector.broadcast %cst_35 : f32 to vector<8x1xf32>
    %160 = arith.cmpf ogt, %153, %159 : vector<8x1xf32>
    %161 = vector.extract_strided_slice %103 {offsets = [0, 2], sizes = [8, 1], strides = [1, 1]} : vector<8x3xf32> to vector<8x1xf32>
    %cst_36 = arith.constant 1.000000e+30 : f32
    %162 = vector.broadcast %cst_36 : f32 to vector<8x1xf32>
    %163 = arith.select %160, %162, %161 : vector<8x1xi1>, vector<8x1xf32>
    %164 = vector.shape_cast %163 : vector<8x1xf32> to vector<1x8x1xf32>
    %cst_37 = arith.constant dense<0x7F800000> : vector<1xf32>
    %165 = vector.multi_reduction <minimumf>, %164, %cst_37 [1, 2] : vector<1x8x1xf32> to vector<1xf32>
    %166 = vector.shape_cast %165 : vector<1xf32> to vector<1x1x1xf32>
    %167 = vector.extract %166[0, 0, 0] : f32 from vector<1x1x1xf32>
    %168 = vector.broadcast %167 : f32 to vector<8x1xf32>
    %169 = arith.cmpf oeq, %163, %168 : vector<8x1xf32>
    %cst_38 = arith.constant 8.000000e+00 : f32
    %170 = vector.broadcast %cst_38 : f32 to vector<8x1xf32>
    %171 = arith.select %169, %18, %170 : vector<8x1xi1>, vector<8x1xf32>
    %172 = vector.shape_cast %171 : vector<8x1xf32> to vector<1x8x1xf32>
    %cst_39 = arith.constant dense<0x7F800000> : vector<1xf32>
    %173 = vector.multi_reduction <minimumf>, %172, %cst_39 [1, 2] : vector<1x8x1xf32> to vector<1xf32>
    %174 = vector.shape_cast %173 : vector<1xf32> to vector<1x1x1xf32>
    %175 = vector.extract %174[0, 0, 0] : f32 from vector<1x1x1xf32>
    %176 = arith.fptosi %175 : f32 to i32
    %c2_i32 = arith.constant 2 : i32
    %177 = vector.broadcast %c2_i32 : i32 to vector<1x6xi32>
    %178 = arith.cmpi eq, %16, %177 : vector<1x6xi32>
    %c0_i32_40 = arith.constant 0 : i32
    %179 = arith.addi %176, %c0_i32_40 : i32
    %180 = vector.broadcast %179 : i32 to vector<1x6xi32>
    %181 = arith.select %178, %180, %158 : vector<1x6xi1>, vector<1x6xi32>
    %182 = vector.extract_strided_slice %15 {offsets = [8, 0], sizes = [8, 5], strides = [1, 1]} : vector<16x5xf32> to vector<8x5xf32>
    %183 = vector.extract_strided_slice %1 {offsets = [8, 0], sizes = [8, 4], strides = [1, 1]} : vector<16x4xf32> to vector<8x4xf32>
    %184 = vector.extract_strided_slice %19 {offsets = [0, 3], sizes = [1, 3], strides = [1, 1]} : vector<1x6xf32> to vector<1x3xf32>
    %185 = vector.extract_strided_slice %3 {offsets = [0, 3], sizes = [4, 3], strides = [1, 1]} : vector<4x6xf32> to vector<4x3xf32>
    %cst_41 = arith.constant 0.000000e+00 : f32
    %186 = vector.broadcast %cst_41 : f32 to vector<8x3xf32>
    %cst_42 = arith.constant 0.000000e+00 : f32
    %187 = vector.broadcast %cst_42 : f32 to vector<1x3xf32>
    %188 = arith.cmpf oeq, %184, %187 : vector<1x3xf32>
    %189 = vector.extract_strided_slice %182 {offsets = [0, 0], sizes = [8, 1], strides = [1, 1]} : vector<8x5xf32> to vector<8x1xf32>
    %cst_43 = arith.constant 0.000000e+00 : f32
    %190 = vector.shape_cast %188 : vector<1x3xi1> to vector<1x3xi1>
    %191 = vector.broadcast %190 : vector<1x3xi1> to vector<8x3xi1>
    %192 = vector.shape_cast %189 : vector<8x1xf32> to vector<8x1xf32>
    %193 = vector.broadcast %192 : vector<8x1xf32> to vector<8x3xf32>
    %194 = vector.broadcast %cst_43 : f32 to vector<8x3xf32>
    %195 = arith.select %191, %193, %194 : vector<8x3xi1>, vector<8x3xf32>
    %196 = arith.subf %186, %195 : vector<8x3xf32>
    %cst_44 = arith.constant 1.000000e+00 : f32
    %197 = vector.broadcast %cst_44 : f32 to vector<1x3xf32>
    %198 = arith.cmpf oeq, %184, %197 : vector<1x3xf32>
    %199 = vector.extract_strided_slice %182 {offsets = [0, 1], sizes = [8, 1], strides = [1, 1]} : vector<8x5xf32> to vector<8x1xf32>
    %cst_45 = arith.constant 0.000000e+00 : f32
    %200 = vector.shape_cast %198 : vector<1x3xi1> to vector<1x3xi1>
    %201 = vector.broadcast %200 : vector<1x3xi1> to vector<8x3xi1>
    %202 = vector.shape_cast %199 : vector<8x1xf32> to vector<8x1xf32>
    %203 = vector.broadcast %202 : vector<8x1xf32> to vector<8x3xf32>
    %204 = vector.broadcast %cst_45 : f32 to vector<8x3xf32>
    %205 = arith.select %201, %203, %204 : vector<8x3xi1>, vector<8x3xf32>
    %206 = arith.subf %196, %205 : vector<8x3xf32>
    %cst_46 = arith.constant 2.000000e+00 : f32
    %207 = vector.broadcast %cst_46 : f32 to vector<1x3xf32>
    %208 = arith.cmpf oeq, %184, %207 : vector<1x3xf32>
    %209 = vector.extract_strided_slice %182 {offsets = [0, 2], sizes = [8, 1], strides = [1, 1]} : vector<8x5xf32> to vector<8x1xf32>
    %cst_47 = arith.constant 0.000000e+00 : f32
    %210 = vector.shape_cast %208 : vector<1x3xi1> to vector<1x3xi1>
    %211 = vector.broadcast %210 : vector<1x3xi1> to vector<8x3xi1>
    %212 = vector.shape_cast %209 : vector<8x1xf32> to vector<8x1xf32>
    %213 = vector.broadcast %212 : vector<8x1xf32> to vector<8x3xf32>
    %214 = vector.broadcast %cst_47 : f32 to vector<8x3xf32>
    %215 = arith.select %211, %213, %214 : vector<8x3xi1>, vector<8x3xf32>
    %216 = arith.subf %206, %215 : vector<8x3xf32>
    %cst_48 = arith.constant 3.000000e+00 : f32
    %217 = vector.broadcast %cst_48 : f32 to vector<1x3xf32>
    %218 = arith.cmpf oeq, %184, %217 : vector<1x3xf32>
    %219 = vector.extract_strided_slice %182 {offsets = [0, 3], sizes = [8, 1], strides = [1, 1]} : vector<8x5xf32> to vector<8x1xf32>
    %cst_49 = arith.constant 0.000000e+00 : f32
    %220 = vector.shape_cast %218 : vector<1x3xi1> to vector<1x3xi1>
    %221 = vector.broadcast %220 : vector<1x3xi1> to vector<8x3xi1>
    %222 = vector.shape_cast %219 : vector<8x1xf32> to vector<8x1xf32>
    %223 = vector.broadcast %222 : vector<8x1xf32> to vector<8x3xf32>
    %224 = vector.broadcast %cst_49 : f32 to vector<8x3xf32>
    %225 = arith.select %221, %223, %224 : vector<8x3xi1>, vector<8x3xf32>
    %226 = arith.subf %216, %225 : vector<8x3xf32>
    %cst_50 = arith.constant 4.000000e+00 : f32
    %227 = vector.broadcast %cst_50 : f32 to vector<1x3xf32>
    %228 = arith.cmpf oeq, %184, %227 : vector<1x3xf32>
    %229 = vector.extract_strided_slice %182 {offsets = [0, 4], sizes = [8, 1], strides = [1, 1]} : vector<8x5xf32> to vector<8x1xf32>
    %cst_51 = arith.constant 0.000000e+00 : f32
    %230 = vector.shape_cast %228 : vector<1x3xi1> to vector<1x3xi1>
    %231 = vector.broadcast %230 : vector<1x3xi1> to vector<8x3xi1>
    %232 = vector.shape_cast %229 : vector<8x1xf32> to vector<8x1xf32>
    %233 = vector.broadcast %232 : vector<8x1xf32> to vector<8x3xf32>
    %234 = vector.broadcast %cst_51 : f32 to vector<8x3xf32>
    %235 = arith.select %231, %233, %234 : vector<8x3xi1>, vector<8x3xf32>
    %236 = arith.subf %226, %235 : vector<8x3xf32>
    %237 = vector.extract_strided_slice %183 {offsets = [0, 0], sizes = [8, 1], strides = [1, 1]} : vector<8x4xf32> to vector<8x1xf32>
    %238 = vector.extract_strided_slice %185 {offsets = [0, 0], sizes = [1, 3], strides = [1, 1]} : vector<4x3xf32> to vector<1x3xf32>
    %239 = vector.broadcast %237 : vector<8x1xf32> to vector<8x3xf32>
    %240 = vector.broadcast %238 : vector<1x3xf32> to vector<8x3xf32>
    %241 = arith.subf %239, %240 : vector<8x3xf32>
    %242 = math.absf %241 : vector<8x3xf32>
    %243 = arith.addf %236, %242 : vector<8x3xf32>
    %244 = vector.extract_strided_slice %183 {offsets = [0, 1], sizes = [8, 1], strides = [1, 1]} : vector<8x4xf32> to vector<8x1xf32>
    %245 = vector.extract_strided_slice %185 {offsets = [1, 0], sizes = [1, 3], strides = [1, 1]} : vector<4x3xf32> to vector<1x3xf32>
    %246 = vector.broadcast %244 : vector<8x1xf32> to vector<8x3xf32>
    %247 = vector.broadcast %245 : vector<1x3xf32> to vector<8x3xf32>
    %248 = arith.subf %246, %247 : vector<8x3xf32>
    %249 = math.absf %248 : vector<8x3xf32>
    %250 = arith.addf %243, %249 : vector<8x3xf32>
    %251 = vector.extract_strided_slice %183 {offsets = [0, 2], sizes = [8, 1], strides = [1, 1]} : vector<8x4xf32> to vector<8x1xf32>
    %252 = vector.extract_strided_slice %185 {offsets = [2, 0], sizes = [1, 3], strides = [1, 1]} : vector<4x3xf32> to vector<1x3xf32>
    %253 = vector.broadcast %251 : vector<8x1xf32> to vector<8x3xf32>
    %254 = vector.broadcast %252 : vector<1x3xf32> to vector<8x3xf32>
    %255 = arith.subf %253, %254 : vector<8x3xf32>
    %256 = math.absf %255 : vector<8x3xf32>
    %257 = arith.addf %250, %256 : vector<8x3xf32>
    %258 = vector.extract_strided_slice %183 {offsets = [0, 3], sizes = [8, 1], strides = [1, 1]} : vector<8x4xf32> to vector<8x1xf32>
    %259 = vector.extract_strided_slice %185 {offsets = [3, 0], sizes = [1, 3], strides = [1, 1]} : vector<4x3xf32> to vector<1x3xf32>
    %260 = vector.broadcast %258 : vector<8x1xf32> to vector<8x3xf32>
    %261 = vector.broadcast %259 : vector<1x3xf32> to vector<8x3xf32>
    %262 = arith.subf %260, %261 : vector<8x3xf32>
    %263 = math.absf %262 : vector<8x3xf32>
    %264 = arith.addf %257, %263 : vector<8x3xf32>
    %cst_52 = arith.constant 0.000000e+00 : f32
    %265 = vector.broadcast %cst_52 : f32 to vector<8x1xf32>
    %cst_53 = arith.constant 0.000000e+00 : f32
    %266 = vector.broadcast %cst_53 : f32 to vector<8x1xf32>
    %267 = arith.cmpf ogt, %265, %266 : vector<8x1xf32>
    %268 = vector.extract_strided_slice %264 {offsets = [0, 0], sizes = [8, 1], strides = [1, 1]} : vector<8x3xf32> to vector<8x1xf32>
    %cst_54 = arith.constant 1.000000e+30 : f32
    %269 = vector.broadcast %cst_54 : f32 to vector<8x1xf32>
    %270 = arith.select %267, %269, %268 : vector<8x1xi1>, vector<8x1xf32>
    %271 = vector.shape_cast %270 : vector<8x1xf32> to vector<1x8x1xf32>
    %cst_55 = arith.constant dense<0x7F800000> : vector<1xf32>
    %272 = vector.multi_reduction <minimumf>, %271, %cst_55 [1, 2] : vector<1x8x1xf32> to vector<1xf32>
    %273 = vector.shape_cast %272 : vector<1xf32> to vector<1x1x1xf32>
    %274 = vector.extract %273[0, 0, 0] : f32 from vector<1x1x1xf32>
    %275 = vector.broadcast %274 : f32 to vector<8x1xf32>
    %276 = arith.cmpf oeq, %270, %275 : vector<8x1xf32>
    %cst_56 = arith.constant 8.000000e+00 : f32
    %277 = vector.broadcast %cst_56 : f32 to vector<8x1xf32>
    %278 = arith.select %276, %18, %277 : vector<8x1xi1>, vector<8x1xf32>
    %279 = vector.shape_cast %278 : vector<8x1xf32> to vector<1x8x1xf32>
    %cst_57 = arith.constant dense<0x7F800000> : vector<1xf32>
    %280 = vector.multi_reduction <minimumf>, %279, %cst_57 [1, 2] : vector<1x8x1xf32> to vector<1xf32>
    %281 = vector.shape_cast %280 : vector<1xf32> to vector<1x1x1xf32>
    %282 = vector.extract %281[0, 0, 0] : f32 from vector<1x1x1xf32>
    %283 = arith.fptosi %282 : f32 to i32
    %284 = vector.broadcast %283 : i32 to vector<8x1xi32>
    %285 = arith.cmpi eq, %17, %284 : vector<8x1xi32>
    %cst_58 = arith.constant 1.000000e+00 : f32
    %286 = vector.broadcast %cst_58 : f32 to vector<8x1xf32>
    %287 = arith.select %285, %286, %265 : vector<8x1xi1>, vector<8x1xf32>
    %c3_i32 = arith.constant 3 : i32
    %288 = vector.broadcast %c3_i32 : i32 to vector<1x6xi32>
    %289 = arith.cmpi eq, %16, %288 : vector<1x6xi32>
    %c8_i32 = arith.constant 8 : i32
    %290 = arith.addi %283, %c8_i32 : i32
    %291 = vector.broadcast %290 : i32 to vector<1x6xi32>
    %292 = arith.select %289, %291, %181 : vector<1x6xi1>, vector<1x6xi32>
    %cst_59 = arith.constant 0.000000e+00 : f32
    %293 = vector.broadcast %cst_59 : f32 to vector<8x1xf32>
    %294 = arith.cmpf ogt, %287, %293 : vector<8x1xf32>
    %295 = vector.extract_strided_slice %264 {offsets = [0, 1], sizes = [8, 1], strides = [1, 1]} : vector<8x3xf32> to vector<8x1xf32>
    %cst_60 = arith.constant 1.000000e+30 : f32
    %296 = vector.broadcast %cst_60 : f32 to vector<8x1xf32>
    %297 = arith.select %294, %296, %295 : vector<8x1xi1>, vector<8x1xf32>
    %298 = vector.shape_cast %297 : vector<8x1xf32> to vector<1x8x1xf32>
    %cst_61 = arith.constant dense<0x7F800000> : vector<1xf32>
    %299 = vector.multi_reduction <minimumf>, %298, %cst_61 [1, 2] : vector<1x8x1xf32> to vector<1xf32>
    %300 = vector.shape_cast %299 : vector<1xf32> to vector<1x1x1xf32>
    %301 = vector.extract %300[0, 0, 0] : f32 from vector<1x1x1xf32>
    %302 = vector.broadcast %301 : f32 to vector<8x1xf32>
    %303 = arith.cmpf oeq, %297, %302 : vector<8x1xf32>
    %cst_62 = arith.constant 8.000000e+00 : f32
    %304 = vector.broadcast %cst_62 : f32 to vector<8x1xf32>
    %305 = arith.select %303, %18, %304 : vector<8x1xi1>, vector<8x1xf32>
    %306 = vector.shape_cast %305 : vector<8x1xf32> to vector<1x8x1xf32>
    %cst_63 = arith.constant dense<0x7F800000> : vector<1xf32>
    %307 = vector.multi_reduction <minimumf>, %306, %cst_63 [1, 2] : vector<1x8x1xf32> to vector<1xf32>
    %308 = vector.shape_cast %307 : vector<1xf32> to vector<1x1x1xf32>
    %309 = vector.extract %308[0, 0, 0] : f32 from vector<1x1x1xf32>
    %310 = arith.fptosi %309 : f32 to i32
    %311 = vector.broadcast %310 : i32 to vector<8x1xi32>
    %312 = arith.cmpi eq, %17, %311 : vector<8x1xi32>
    %cst_64 = arith.constant 1.000000e+00 : f32
    %313 = vector.broadcast %cst_64 : f32 to vector<8x1xf32>
    %314 = arith.select %312, %313, %287 : vector<8x1xi1>, vector<8x1xf32>
    %c4_i32 = arith.constant 4 : i32
    %315 = vector.broadcast %c4_i32 : i32 to vector<1x6xi32>
    %316 = arith.cmpi eq, %16, %315 : vector<1x6xi32>
    %c8_i32_65 = arith.constant 8 : i32
    %317 = arith.addi %310, %c8_i32_65 : i32
    %318 = vector.broadcast %317 : i32 to vector<1x6xi32>
    %319 = arith.select %316, %318, %292 : vector<1x6xi1>, vector<1x6xi32>
    %cst_66 = arith.constant 0.000000e+00 : f32
    %320 = vector.broadcast %cst_66 : f32 to vector<8x1xf32>
    %321 = arith.cmpf ogt, %314, %320 : vector<8x1xf32>
    %322 = vector.extract_strided_slice %264 {offsets = [0, 2], sizes = [8, 1], strides = [1, 1]} : vector<8x3xf32> to vector<8x1xf32>
    %cst_67 = arith.constant 1.000000e+30 : f32
    %323 = vector.broadcast %cst_67 : f32 to vector<8x1xf32>
    %324 = arith.select %321, %323, %322 : vector<8x1xi1>, vector<8x1xf32>
    %325 = vector.shape_cast %324 : vector<8x1xf32> to vector<1x8x1xf32>
    %cst_68 = arith.constant dense<0x7F800000> : vector<1xf32>
    %326 = vector.multi_reduction <minimumf>, %325, %cst_68 [1, 2] : vector<1x8x1xf32> to vector<1xf32>
    %327 = vector.shape_cast %326 : vector<1xf32> to vector<1x1x1xf32>
    %328 = vector.extract %327[0, 0, 0] : f32 from vector<1x1x1xf32>
    %329 = vector.broadcast %328 : f32 to vector<8x1xf32>
    %330 = arith.cmpf oeq, %324, %329 : vector<8x1xf32>
    %cst_69 = arith.constant 8.000000e+00 : f32
    %331 = vector.broadcast %cst_69 : f32 to vector<8x1xf32>
    %332 = arith.select %330, %18, %331 : vector<8x1xi1>, vector<8x1xf32>
    %333 = vector.shape_cast %332 : vector<8x1xf32> to vector<1x8x1xf32>
    %cst_70 = arith.constant dense<0x7F800000> : vector<1xf32>
    %334 = vector.multi_reduction <minimumf>, %333, %cst_70 [1, 2] : vector<1x8x1xf32> to vector<1xf32>
    %335 = vector.shape_cast %334 : vector<1xf32> to vector<1x1x1xf32>
    %336 = vector.extract %335[0, 0, 0] : f32 from vector<1x1x1xf32>
    %337 = arith.fptosi %336 : f32 to i32
    %c5_i32 = arith.constant 5 : i32
    %338 = vector.broadcast %c5_i32 : i32 to vector<1x6xi32>
    %339 = arith.cmpi eq, %16, %338 : vector<1x6xi32>
    %c8_i32_71 = arith.constant 8 : i32
    %340 = arith.addi %337, %c8_i32_71 : i32
    %341 = vector.broadcast %340 : i32 to vector<1x6xi32>
    %342 = arith.select %339, %341, %319 : vector<1x6xi1>, vector<1x6xi32>
    %343 = tpu.iota {dimensions = array<i32: 0>} : vector<16x6xi32>
    %344 = vector.broadcast %342 : vector<1x6xi32> to vector<16x6xi32>
    %345 = arith.cmpi eq, %343, %344 : vector<16x6xi32>
    %cst_72 = arith.constant -1.000000e+00 : f32
    %346 = vector.shape_cast %19 : vector<1x6xf32> to vector<1x6xf32>
    %347 = vector.broadcast %346 : vector<1x6xf32> to vector<16x6xf32>
    %348 = vector.broadcast %cst_72 : f32 to vector<16x6xf32>
    %349 = arith.select %345, %347, %348 : vector<16x6xi1>, vector<16x6xf32>
    %cst_73 = arith.constant dense<0xFF800000> : vector<16xf32>
    %350 = vector.multi_reduction <maximumf>, %349, %cst_73 [1] : vector<16x6xf32> to vector<16xf32>
    %351 = vector.shape_cast %350 : vector<16xf32> to vector<16x1xf32>
    %cst_74 = arith.constant 0.000000e+00 : f32
    %352 = vector.broadcast %cst_74 : f32 to vector<16x1xf32>
    %353 = arith.cmpf oge, %351, %352 : vector<16x1xf32>
    %354 = arith.fptosi %351 : vector<16x1xf32> to vector<16x1xi32>
    %c4_i32_75 = arith.constant 4 : i32
    %355 = vector.broadcast %c4_i32_75 : i32 to vector<16x1xi32>
    %356 = arith.select %353, %354, %355 : vector<16x1xi1>, vector<16x1xi32>
    %357 = tpu.iota {dimensions = array<i32: 1>} : vector<16x5xi32>
    %358 = vector.broadcast %356 : vector<16x1xi32> to vector<16x5xi32>
    %359 = arith.cmpi eq, %357, %358 : vector<16x5xi32>
    %cst_76 = arith.constant 0.000000e+00 : f32
    %360 = vector.broadcast %cst_76 : f32 to vector<16x5xf32>
    %361 = arith.select %359, %13, %360 : vector<16x5xi1>, vector<16x5xf32>
    %cst_77 = arith.constant dense<0.000000e+00> : vector<16xf32>
    %362 = vector.multi_reduction <add>, %361, %cst_77 [1] : vector<16x5xf32> to vector<16xf32>
    %363 = vector.shape_cast %362 : vector<16xf32> to vector<16x1xf32>
    %cst_78 = arith.constant 0.000000e+00 : f32
    %364 = vector.broadcast %cst_78 : f32 to vector<16x1xf32>
    %365 = arith.subf %364, %363 : vector<16x1xf32>
    %c4_i32_79 = arith.constant 4 : i32
    %366 = vector.broadcast %c4_i32_79 : i32 to vector<16x1xi32>
    %367 = arith.cmpi eq, %356, %366 : vector<16x1xi32>
    %cst_80 = arith.constant 1.000000e-01 : f32
    %cst_81 = arith.constant 1.000000e+00 : f32
    %368 = vector.broadcast %cst_80 : f32 to vector<16x1xf32>
    %369 = vector.broadcast %cst_81 : f32 to vector<16x1xf32>
    %370 = arith.select %367, %368, %369 : vector<16x1xi1>, vector<16x1xf32>
    %371 = arith.mulf %365, %370 : vector<16x1xf32>
    %372 = vector.shape_cast %371 : vector<16x1xf32> to vector<1x16x1xf32>
    %cst_82 = arith.constant dense<0.000000e+00> : vector<1xf32>
    %373 = vector.multi_reduction <add>, %372, %cst_82 [1, 2] : vector<1x16x1xf32> to vector<1xf32>
    %374 = vector.shape_cast %373 : vector<1xf32> to vector<1x1x1xf32>
    %375 = vector.extract %374[0, 0, 0] : f32 from vector<1x1x1xf32>
    %376 = vector.shape_cast %370 : vector<16x1xf32> to vector<1x16x1xf32>
    %cst_83 = arith.constant dense<0.000000e+00> : vector<1xf32>
    %377 = vector.multi_reduction <add>, %376, %cst_83 [1, 2] : vector<1x16x1xf32> to vector<1xf32>
    %378 = vector.shape_cast %377 : vector<1xf32> to vector<1x1x1xf32>
    %379 = vector.extract %378[0, 0, 0] : f32 from vector<1x1x1xf32>
    %380 = arith.divf %375, %379 : f32
    %381 = arith.extui %345 : vector<16x6xi1> to vector<16x6xi32>
    %382 = arith.sitofp %381 : vector<16x6xi32> to vector<16x6xf32>
    %383 = vector.extract_strided_slice %1 {offsets = [0, 0], sizes = [16, 1], strides = [1, 1]} : vector<16x4xf32> to vector<16x1xf32>
    %384 = vector.broadcast %383 : vector<16x1xf32> to vector<16x6xf32>
    %385 = arith.mulf %384, %382 : vector<16x6xf32>
    %cst_84 = arith.constant dense<0.000000e+00> : vector<6xf32>
    %386 = vector.multi_reduction <add>, %385, %cst_84 [0] : vector<16x6xf32> to vector<6xf32>
    %387 = vector.shape_cast %386 : vector<6xf32> to vector<1x6xf32>
    %388 = vector.extract_strided_slice %1 {offsets = [0, 1], sizes = [16, 1], strides = [1, 1]} : vector<16x4xf32> to vector<16x1xf32>
    %389 = vector.broadcast %388 : vector<16x1xf32> to vector<16x6xf32>
    %390 = arith.mulf %389, %382 : vector<16x6xf32>
    %cst_85 = arith.constant dense<0.000000e+00> : vector<6xf32>
    %391 = vector.multi_reduction <add>, %390, %cst_85 [0] : vector<16x6xf32> to vector<6xf32>
    %392 = vector.shape_cast %391 : vector<6xf32> to vector<1x6xf32>
    %393 = vector.extract_strided_slice %1 {offsets = [0, 2], sizes = [16, 1], strides = [1, 1]} : vector<16x4xf32> to vector<16x1xf32>
    %394 = vector.broadcast %393 : vector<16x1xf32> to vector<16x6xf32>
    %395 = arith.mulf %394, %382 : vector<16x6xf32>
    %cst_86 = arith.constant dense<0.000000e+00> : vector<6xf32>
    %396 = vector.multi_reduction <add>, %395, %cst_86 [0] : vector<16x6xf32> to vector<6xf32>
    %397 = vector.shape_cast %396 : vector<6xf32> to vector<1x6xf32>
    %398 = vector.extract_strided_slice %1 {offsets = [0, 3], sizes = [16, 1], strides = [1, 1]} : vector<16x4xf32> to vector<16x1xf32>
    %399 = vector.broadcast %398 : vector<16x1xf32> to vector<16x6xf32>
    %400 = arith.mulf %399, %382 : vector<16x6xf32>
    %cst_87 = arith.constant dense<0.000000e+00> : vector<6xf32>
    %401 = vector.multi_reduction <add>, %400, %cst_87 [0] : vector<16x6xf32> to vector<6xf32>
    %402 = vector.shape_cast %401 : vector<6xf32> to vector<1x6xf32>
    %403 = vector.extract_strided_slice %3 {offsets = [0, 0], sizes = [1, 6], strides = [1, 1]} : vector<4x6xf32> to vector<1x6xf32>
    %404 = vector.extract_strided_slice %3 {offsets = [1, 0], sizes = [1, 6], strides = [1, 1]} : vector<4x6xf32> to vector<1x6xf32>
    %405 = vector.extract_strided_slice %3 {offsets = [2, 0], sizes = [1, 6], strides = [1, 1]} : vector<4x6xf32> to vector<1x6xf32>
    %406 = vector.extract_strided_slice %3 {offsets = [3, 0], sizes = [1, 6], strides = [1, 1]} : vector<4x6xf32> to vector<1x6xf32>
    %407 = arith.subf %387, %403 : vector<1x6xf32>
    %408 = math.absf %407 : vector<1x6xf32>
    %409 = vector.shape_cast %408 : vector<1x6xf32> to vector<1x1x6xf32>
    %cst_88 = arith.constant dense<0.000000e+00> : vector<1xf32>
    %410 = vector.multi_reduction <add>, %409, %cst_88 [1, 2] : vector<1x1x6xf32> to vector<1xf32>
    %411 = vector.shape_cast %410 : vector<1xf32> to vector<1x1x1xf32>
    %412 = vector.extract %411[0, 0, 0] : f32 from vector<1x1x1xf32>
    %413 = arith.subf %392, %404 : vector<1x6xf32>
    %414 = math.absf %413 : vector<1x6xf32>
    %415 = vector.shape_cast %414 : vector<1x6xf32> to vector<1x1x6xf32>
    %cst_89 = arith.constant dense<0.000000e+00> : vector<1xf32>
    %416 = vector.multi_reduction <add>, %415, %cst_89 [1, 2] : vector<1x1x6xf32> to vector<1xf32>
    %417 = vector.shape_cast %416 : vector<1xf32> to vector<1x1x1xf32>
    %418 = vector.extract %417[0, 0, 0] : f32 from vector<1x1x1xf32>
    %419 = arith.addf %412, %418 : f32
    %420 = arith.subf %397, %405 : vector<1x6xf32>
    %421 = math.absf %420 : vector<1x6xf32>
    %422 = vector.shape_cast %421 : vector<1x6xf32> to vector<1x1x6xf32>
    %cst_90 = arith.constant dense<0.000000e+00> : vector<1xf32>
    %423 = vector.multi_reduction <add>, %422, %cst_90 [1, 2] : vector<1x1x6xf32> to vector<1xf32>
    %424 = vector.shape_cast %423 : vector<1xf32> to vector<1x1x1xf32>
    %425 = vector.extract %424[0, 0, 0] : f32 from vector<1x1x1xf32>
    %426 = arith.addf %419, %425 : f32
    %427 = arith.subf %402, %406 : vector<1x6xf32>
    %428 = math.absf %427 : vector<1x6xf32>
    %429 = vector.shape_cast %428 : vector<1x6xf32> to vector<1x1x6xf32>
    %cst_91 = arith.constant dense<0.000000e+00> : vector<1xf32>
    %430 = vector.multi_reduction <add>, %429, %cst_91 [1, 2] : vector<1x1x6xf32> to vector<1xf32>
    %431 = vector.shape_cast %430 : vector<1xf32> to vector<1x1x1xf32>
    %432 = vector.extract %431[0, 0, 0] : f32 from vector<1x1x1xf32>
    %433 = arith.addf %426, %432 : f32
    %cst_92 = arith.constant 2.400000e+01 : f32
    %434 = arith.divf %433, %cst_92 : f32
    %cst_93 = arith.constant 5.000000e-01 : f32
    %435 = vector.broadcast %cst_93 : f32 to vector<1x6xf32>
    %436 = arith.mulf %435, %397 : vector<1x6xf32>
    %437 = arith.subf %387, %436 : vector<1x6xf32>
    %cst_94 = arith.constant 5.000000e-01 : f32
    %438 = vector.broadcast %cst_94 : f32 to vector<1x6xf32>
    %439 = arith.mulf %438, %402 : vector<1x6xf32>
    %440 = arith.subf %392, %439 : vector<1x6xf32>
    %cst_95 = arith.constant 5.000000e-01 : f32
    %441 = vector.broadcast %cst_95 : f32 to vector<1x6xf32>
    %442 = arith.mulf %441, %397 : vector<1x6xf32>
    %443 = arith.addf %387, %442 : vector<1x6xf32>
    %cst_96 = arith.constant 5.000000e-01 : f32
    %444 = vector.broadcast %cst_96 : f32 to vector<1x6xf32>
    %445 = arith.mulf %444, %402 : vector<1x6xf32>
    %446 = arith.addf %392, %445 : vector<1x6xf32>
    %cst_97 = arith.constant 5.000000e-01 : f32
    %447 = vector.broadcast %cst_97 : f32 to vector<1x6xf32>
    %448 = arith.mulf %447, %405 : vector<1x6xf32>
    %449 = arith.subf %403, %448 : vector<1x6xf32>
    %cst_98 = arith.constant 5.000000e-01 : f32
    %450 = vector.broadcast %cst_98 : f32 to vector<1x6xf32>
    %451 = arith.mulf %450, %406 : vector<1x6xf32>
    %452 = arith.subf %404, %451 : vector<1x6xf32>
    %cst_99 = arith.constant 5.000000e-01 : f32
    %453 = vector.broadcast %cst_99 : f32 to vector<1x6xf32>
    %454 = arith.mulf %453, %405 : vector<1x6xf32>
    %455 = arith.addf %403, %454 : vector<1x6xf32>
    %cst_100 = arith.constant 5.000000e-01 : f32
    %456 = vector.broadcast %cst_100 : f32 to vector<1x6xf32>
    %457 = arith.mulf %456, %406 : vector<1x6xf32>
    %458 = arith.addf %404, %457 : vector<1x6xf32>
    %459 = arith.subf %443, %437 : vector<1x6xf32>
    %460 = arith.subf %446, %440 : vector<1x6xf32>
    %461 = arith.mulf %459, %460 : vector<1x6xf32>
    %462 = arith.subf %455, %449 : vector<1x6xf32>
    %463 = arith.subf %458, %452 : vector<1x6xf32>
    %464 = arith.mulf %462, %463 : vector<1x6xf32>
    %465 = arith.maximumf %437, %449 : vector<1x6xf32>
    %466 = arith.maximumf %440, %452 : vector<1x6xf32>
    %467 = arith.minimumf %443, %455 : vector<1x6xf32>
    %468 = arith.minimumf %446, %458 : vector<1x6xf32>
    %469 = arith.subf %467, %465 : vector<1x6xf32>
    %cst_101 = arith.constant 0.000000e+00 : f32
    %470 = vector.broadcast %cst_101 : f32 to vector<1x6xf32>
    %471 = arith.maximumf %469, %470 : vector<1x6xf32>
    %472 = arith.subf %468, %466 : vector<1x6xf32>
    %cst_102 = arith.constant 0.000000e+00 : f32
    %473 = vector.broadcast %cst_102 : f32 to vector<1x6xf32>
    %474 = arith.maximumf %472, %473 : vector<1x6xf32>
    %475 = arith.mulf %471, %474 : vector<1x6xf32>
    %476 = arith.addf %461, %464 : vector<1x6xf32>
    %477 = arith.subf %476, %475 : vector<1x6xf32>
    %cst_103 = arith.constant 1.000000e-07 : f32
    %478 = vector.broadcast %cst_103 : f32 to vector<1x6xf32>
    %479 = arith.addf %477, %478 : vector<1x6xf32>
    %480 = arith.divf %475, %479 : vector<1x6xf32>
    %481 = arith.minimumf %437, %449 : vector<1x6xf32>
    %482 = arith.minimumf %440, %452 : vector<1x6xf32>
    %483 = arith.maximumf %443, %455 : vector<1x6xf32>
    %484 = arith.maximumf %446, %458 : vector<1x6xf32>
    %485 = arith.subf %483, %481 : vector<1x6xf32>
    %486 = arith.subf %484, %482 : vector<1x6xf32>
    %487 = arith.mulf %485, %486 : vector<1x6xf32>
    %488 = arith.subf %487, %477 : vector<1x6xf32>
    %cst_104 = arith.constant 1.000000e-07 : f32
    %489 = vector.broadcast %cst_104 : f32 to vector<1x6xf32>
    %490 = arith.addf %487, %489 : vector<1x6xf32>
    %491 = arith.divf %488, %490 : vector<1x6xf32>
    %492 = arith.subf %480, %491 : vector<1x6xf32>
    %cst_105 = arith.constant 1.000000e+00 : f32
    %493 = vector.broadcast %cst_105 : f32 to vector<1x6xf32>
    %494 = arith.subf %493, %492 : vector<1x6xf32>
    %495 = vector.shape_cast %494 : vector<1x6xf32> to vector<1x1x6xf32>
    %cst_106 = arith.constant dense<0.000000e+00> : vector<1xf32>
    %496 = vector.multi_reduction <add>, %495, %cst_106 [1, 2] : vector<1x1x6xf32> to vector<1xf32>
    %497 = vector.shape_cast %496 : vector<1xf32> to vector<1x1x1xf32>
    %498 = vector.extract %497[0, 0, 0] : f32 from vector<1x1x1xf32>
    %cst_107 = arith.constant 6.000000e+00 : f32
    %499 = arith.divf %498, %cst_107 : f32
    %cst_108 = arith.constant 1.000000e+00 : f32
    %500 = arith.mulf %cst_108, %380 : f32
    %cst_109 = arith.constant 1.000000e+00 : f32
    %501 = arith.mulf %cst_109, %434 : f32
    %502 = arith.addf %500, %501 : f32
    %cst_110 = arith.constant 1.000000e+00 : f32
    %503 = arith.mulf %cst_110, %499 : f32
    %504 = arith.addf %502, %503 : f32
    %505 = vector.broadcast %504 : f32 to vector<1x1xf32>
    %c0_111 = arith.constant 0 : index
    %c0_112 = arith.constant 0 : index
    %506 = vector.load %arg4[%c0_111, %c0_112] : memref<1x1xf32, #tpu.memory_space<vmem>>, vector<1x1xf32>
    tpu.vector_store %arg4[%c0_111, %c0_112], %505 {strides = array<i32>} : memref<1x1xf32, #tpu.memory_space<vmem>>, vector<1x1xf32>,
    return
  }
}

</mosaic_0001>

<llo_original>
// kernel: set_criterion_forward.1
$region0: #{set_criterion_forward.1}
  #allocation0 [shape = 'u32[]', space=smem, size = 0x4, offset = 0x4, fixed_abs, tag = 'smem constant byte address 0x4 - core index']
  #allocation1 [shape = 'u32[72,128]{1,0:T(1,128)}', space=vmem, size = 0x9000, scoped, tag = 'internal scratch']
  %s0 = inlined_call_operand.vmem [shape: f32[16,5], index: 0, kind: input, shape index: {}]
  %s1 = inlined_call_operand.vmem [shape: f32[16,4], index: 1, kind: input, shape index: {}]
  %s2 = inlined_call_operand.vmem [shape: s32[1,6], index: 2, kind: input, shape index: {}]
  %s3 = inlined_call_operand.vmem [shape: f32[4,6], index: 3, kind: input, shape index: {}]
  %s4 = inlined_call_operand.hbm [shape: f32[1,1], index: 4, kind: output, shape index: {}]
  %s5 = sld [smem:[#allocation0]]
  $region26: #{set_criterion_forward.1} parent=0
    _
  %s7 = ssub.s32 1, %s5
  %s8 = scalar_select 0, %s7, %s5
  $region1: #{set_criterion_forward.1} parent=0
    #allocation2 [shape = 'u8[512]{0}', space=vmem, size = 0x400, scoped, tag = 'output window, operand 0, single buffered']
    #allocation3 [shape = 's32[1]{0}', space=sflag, size = 0x4, scoped, tag = 'scoped memory for set_criterion_forward.1']
    %9 = vsyncpa [#allocation3], 0
    // Predicated region
    $region2: #{set_criterion_forward.1} parent=1 // pred_check
      _
    $region3: #{set_criterion_forward.1} parent=1 // pred_check_branch
      %11 = sbr.rel (0) target = $region5
    $region4: #{set_criterion_forward.1} parent=1 // pred_region
      _
    $region5: #{set_criterion_forward.1} parent=1 // pred_fallthru
      _
    // Predicated region
    $region6: #{set_criterion_forward.1} parent=1 // pred_check
      _
    $region7: #{set_criterion_forward.1} parent=1 // pred_check_branch
      %13 = sbr.rel (0) target = $region9
    $region8: #{set_criterion_forward.1} parent=1 // pred_region
      _
    $region9: #{set_criterion_forward.1} parent=1 // pred_fallthru
      _
    // Predicated region
    $region10: #{set_criterion_forward.1} parent=1 // pred_check
      _
    $region11: #{set_criterion_forward.1} parent=1 // pred_check_branch
      %15 = sbr.rel (0) target = $region13
    $region12: #{set_criterion_forward.1} parent=1 // pred_region
      _
    $region13: #{set_criterion_forward.1} parent=1 // pred_fallthru
      _
    // Predicated region
    $region14: #{set_criterion_forward.1} parent=1 // pred_check
      _
    $region15: #{set_criterion_forward.1} parent=1 // pred_check_branch
      %17 = sbr.rel (0) target = $region17
    $region16: #{set_criterion_forward.1} parent=1 // pred_region
      _
    $region17: #{set_criterion_forward.1} parent=1 // pred_fallthru
      _
    %v18 = vld [vmem:[%s0] sm:$0xff]
    %v19 = vld [vmem:[%s0 + $0x8] sm:$0xff]
    %v20 = vld [vmem:[%s1] sm:$0xff]
    %v21 = vld [vmem:[%s1 + $0x8] sm:$0xff]
    %v22 = vld [vmem:[%s2] sm:$0x1]
    %v23 = vld [vmem:[%s3] sm:$0xf]
    %vm24 = vcmask 39936
    %v25 = vsel %vm24, %v18, -inf
    %26 = vmax.xlane.f32.xlu0 %v25
    %v27 = vpop.xlane.xlu0 %26
    %v28 = vsel %vm24, %v19, -inf
    %29 = vmax.xlane.f32.xlu0 %v28
    %v30 = vpop.xlane.xlu0 %29
    %v31 = vsub.f32 %v18, %v27
    %v32 = vsub.f32 %v19, %v30
    %v33 = vmul.f32 %v31, 1.442695
    %v34 = vpow.pop %v33
    %v35 = vmul.f32 %v32, 1.442695
    %v36 = vpow.pop %v35
    %v37 = vsel %vm24, %v34, 0.0
    %38 = vadd.xlane.f32.xlu0 %v37
    %v39 = vpop.xlane.xlu0 %38
    %v40 = vsel %vm24, %v36, 0.0
    %41 = vadd.xlane.f32.xlu0 %v40
    %v42 = vpop.xlane.xlu0 %41
    %v43 = vlog2.pop %v39
    %v44 = vmul.f32 %v43, 0.6931472
    %v45 = vlog2.pop %v42
    %v46 = vmul.f32 %v45, 0.6931472
    %v47 = vsub.f32 %v31, %v44
    %v48 = vsub.f32 %v32, %v46
    %v49 = vrcp.pop %v39
    %v50 = vmul.f32 %v39, %v49
    %v51 = vsub.f32 1.0, %v50
    %v52 = vmul.f32 %v49, %v51
    %v53 = vadd.f32 %v49, %v52
    %vm54 = vweird.f32 %v39
    %vm55 = vweird.f32 %v49
    %vm56 = vmor %vm54, %vm55
    %v57 = vsel %vm56, %v49, %v53
    %v58 = vand.u32 2147483647, %v39
    %vm59 = vcmp.eq.f32.partialorder %v58, 8.507059e+37
    %v60 = vand.u32 %v39, 2147483648
    %v61 = vor.u32 1.1754944e-38, %v60
    %v62 = vsel %vm59, %v61, %v57
    %v63 = vmul.f32 %v34, %v62
    %v64 = vrcp.pop %v42
    %v65 = vmul.f32 %v42, %v64
    %v66 = vsub.f32 1.0, %v65
    %v67 = vmul.f32 %v64, %v66
    %v68 = vadd.f32 %v64, %v67
    %vm69 = vweird.f32 %v42
    %vm70 = vweird.f32 %v64
    %vm71 = vmor %vm69, %vm70
    %v72 = vsel %vm71, %v64, %v68
    %v73 = vand.u32 2147483647, %v42
    %vm74 = vcmp.eq.f32.partialorder %v73, 8.507059e+37
    %v75 = vand.u32 %v42, 2147483648
    %v76 = vor.u32 1.1754944e-38, %v75
    %v77 = vsel %vm74, %v76, %v72
    %v78 = vmul.f32 %v36, %v77
    %v79 = vlaneseq
    %v80 = vand.u32 %v79, 127
    %v81 = vlaneseq
    %v82 = vshrl.u32 %v81, 7
    %v83 = vcvt.s32.f32 %v82
    %v84 = vcvt.s32.f32 %v22
    %vm85 = vcmp.eq.f32.partialorder %v84, 0.0
    %v86 = vsel %vm85, 1, 0
    %v87 = vperm.slane %v86, 0
    %vm88 = vcmp.eq.s32.totalorder %v87, 1
    %90 = vset.pattern.permute.xlu0 0
    %91 = vperm.xlu0 %90, %v63
    %v92 = vpop.permute.xlu0 %91
    %v94 = vsel %vm88, %v92, 0.0
    %v95 = vsub.f32 0.0, %v94
    %vm96 = vcmp.eq.f32.partialorder %v84, 1.0
    %v97 = vsel %vm96, 1, 0
    %v98 = vperm.slane %v97, 0
    %vm99 = vcmp.eq.s32.totalorder %v98, 1
    %100 = vset.pattern.permute.xlu0 1
    %101 = vperm.xlu0 %100, %v63
    %v102 = vpop.permute.xlu0 %101
    %v104 = vsel %vm99, %v102, 0.0
    %v105 = vsub.f32 %v95, %v104
    %vm106 = vcmp.eq.f32.partialorder %v84, 2.0
    %v107 = vsel %vm106, 1, 0
    %v108 = vperm.slane %v107, 0
    %vm109 = vcmp.eq.s32.totalorder %v108, 1
    %110 = vset.pattern.permute.xlu0 2
    %111 = vperm.xlu0 %110, %v63
    %v112 = vpop.permute.xlu0 %111
    %v114 = vsel %vm109, %v112, 0.0
    %v115 = vsub.f32 %v105, %v114
    %vm116 = vcmp.eq.f32.partialorder %v84, 3.0
    %v117 = vsel %vm116, 1, 0
    %v118 = vperm.slane %v117, 0
    %vm119 = vcmp.eq.s32.totalorder %v118, 1
    %120 = vset.pattern.permute.xlu0 3
    %121 = vperm.xlu0 %120, %v63
    %v122 = vpop.permute.xlu0 %121
    %v124 = vsel %vm119, %v122, 0.0
    %v125 = vsub.f32 %v115, %v124
    %vm126 = vcmp.eq.f32.partialorder %v84, 4.0
    %v127 = vsel %vm126, 1, 0
    %v128 = vperm.slane %v127, 0
    %vm129 = vcmp.eq.s32.totalorder %v128, 1
    %130 = vset.pattern.permute.xlu0 4
    %131 = vperm.xlu0 %130, %v63
    %v132 = vpop.permute.xlu0 %131
    %v134 = vsel %vm129, %v132, 0.0
    %v135 = vsub.f32 %v125, %v134
    %137 = vset.pattern.permute.xlu0 0
    %138 = vperm.xlu0 %137, %v20
    %v139 = vpop.permute.xlu0 %138
    %v141 = vperm.slane %v23, 0
    %v142 = vsub.f32 %v139, %v141
    %v143 = vand.u32 2147483647, %v142
    %v144 = vadd.f32 %v135, %v143
    %145 = vset.pattern.permute.xlu0 1
    %146 = vperm.xlu0 %145, %v20
    %v147 = vpop.permute.xlu0 %146
    %v149 = vperm.slane %v23, 1
    %v150 = vsub.f32 %v147, %v149
    %v151 = vand.u32 2147483647, %v150
    %v152 = vadd.f32 %v144, %v151
    %153 = vset.pattern.permute.xlu0 2
    %154 = vperm.xlu0 %153, %v20
    %v155 = vpop.permute.xlu0 %154
    %v157 = vperm.slane %v23, 2
    %v158 = vsub.f32 %v155, %v157
    %v159 = vand.u32 2147483647, %v158
    %v160 = vadd.f32 %v152, %v159
    %161 = vset.pattern.permute.xlu0 3
    %162 = vperm.xlu0 %161, %v20
    %v163 = vpop.permute.xlu0 %162
    %v165 = vperm.slane %v23, 3
    %v166 = vsub.f32 %v163, %v165
    %v167 = vand.u32 2147483647, %v166
    %v168 = vadd.f32 %v160, %v167
    %vm169 = vcmp.gt.f32.partialorder 0.0, 0.0
    %v170 = vsel %vm169, 1e+30, %v168
    %vm171 = vcmask 7168
    %v172 = vsel %vm171, %v170, inf
    %173 = vmin.xlane.f32.xlu0 %v172
    %v174 = vpop.xlane.xlu0 %173
    %v175 = vrot.slane %v174, 4
    %v176 = vmin.f32 %v174, %v175
    %v177 = vrot.slane %v176, 2
    %v178 = vmin.f32 %v176, %v177
    %v179 = vrot.slane %v178, 1
    %v180 = vmin.f32 %v178, %v179
    %s181 = vtos %v180
    %v182 = vstv %s181
    %vm183 = vcmp.eq.f32.partialorder %v170, %v182
    %v184 = vsel %vm183, %v83, 8.0
    %v185 = vsel %vm171, %v184, inf
    %186 = vmin.xlane.f32.xlu0 %v185
    %v187 = vpop.xlane.xlu0 %186
    %v188 = vrot.slane %v187, 4
    %v189 = vmin.f32 %v187, %v188
    %v190 = vrot.slane %v189, 2
    %v191 = vmin.f32 %v189, %v190
    %v192 = vrot.slane %v191, 1
    %v193 = vmin.f32 %v191, %v192
    %s194 = vtos %v193
    %s195 = scvt.f32.s32.to.zero.pseudo %s194
    %v196 = vstv %s195
    %vm197 = vcmp.eq.s32.totalorder %v82, %v196
    %v198 = vsel %vm197, 1.0, 0.0
    %vm199 = vcmp.eq.s32.totalorder %v80, 0
    %v200 = vsel %vm199, %v196, 0
    %vm201 = vcmp.gt.f32.partialorder %v198, 0.0
    %v202 = vsel %vm201, 1e+30, %v168
    %vm203 = vcmask 15368
    %v204 = vsel %vm203, %v202, inf
    %205 = vmin.xlane.f32.xlu0 %v204
    %v206 = vpop.xlane.xlu0 %205
    %v207 = vrot.slane %v206, 4
    %v208 = vmin.f32 %v206, %v207
    %v209 = vrot.slane %v208, 2
    %v210 = vmin.f32 %v208, %v209
    %v211 = vrot.slane %v210, 1
    %v212 = vmin.f32 %v210, %v211
    %s213 = vtos %v212
    %v214 = vstv %s213
    %vm215 = vcmp.eq.f32.partialorder %v202, %v214
    %v216 = vsel %vm215, %v83, 8.0
    %v217 = vsel %vm203, %v216, inf
    %218 = vmin.xlane.f32.xlu0 %v217
    %v219 = vpop.xlane.xlu0 %218
    %v220 = vrot.slane %v219, 4
    %v221 = vmin.f32 %v219, %v220
    %v222 = vrot.slane %v221, 2
    %v223 = vmin.f32 %v221, %v222
    %v224 = vrot.slane %v223, 1
    %v225 = vmin.f32 %v223, %v224
    %s226 = vtos %v225
    %s227 = scvt.f32.s32.to.zero.pseudo %s226
    %v228 = vstv %s227
    %vm229 = vcmp.eq.s32.totalorder %v82, %v228
    %v230 = vsel %vm229, 1.0, %v198
    %vm231 = vcmp.eq.s32.totalorder %v80, 1
    %v232 = vsel %vm231, %v228, %v200
    %vm233 = vcmp.gt.f32.partialorder %v230, 0.0
    %v234 = vsel %vm233, 1e+30, %v168
    %vm235 = vcmask 23568
    %v236 = vsel %vm235, %v234, inf
    %237 = vmin.xlane.f32.xlu0 %v236
    %v238 = vpop.xlane.xlu0 %237
    %v239 = vrot.slane %v238, 4
    %v240 = vmin.f32 %v238, %v239
    %v241 = vrot.slane %v240, 2
    %v242 = vmin.f32 %v240, %v241
    %v243 = vrot.slane %v242, 1
    %v244 = vmin.f32 %v242, %v243
    %s245 = vtos %v244
    %v246 = vstv %s245
    %vm247 = vcmp.eq.f32.partialorder %v234, %v246
    %v248 = vsel %vm247, %v83, 8.0
    %v249 = vsel %vm235, %v248, inf
    %250 = vmin.xlane.f32.xlu0 %v249
    %v251 = vpop.xlane.xlu0 %250
    %v252 = vrot.slane %v251, 4
    %v253 = vmin.f32 %v251, %v252
    %v254 = vrot.slane %v253, 2
    %v255 = vmin.f32 %v253, %v254
    %v256 = vrot.slane %v255, 1
    %v257 = vmin.f32 %v255, %v256
    %s258 = vtos %v257
    %s259 = scvt.f32.s32.to.zero.pseudo %s258
    %vm260 = vcmp.eq.s32.totalorder %v80, 2
    %v261 = vstv %s259
    %v262 = vsel %vm260, %v261, %v232
    %264 = vset.pattern.permute.xlu0 0
    %265 = vperm.xlu0 %264, %v78
    %v266 = vpop.permute.xlu0 %265
    %v268 = vsel %vm88, %v266, 0.0
    %v269 = vsub.f32 0.0, %v268
    %270 = vset.pattern.permute.xlu0 1
    %271 = vperm.xlu0 %270, %v78
    %v272 = vpop.permute.xlu0 %271
    %v274 = vsel %vm99, %v272, 0.0
    %v275 = vsub.f32 %v269, %v274
    %276 = vset.pattern.permute.xlu0 2
    %277 = vperm.xlu0 %276, %v78
    %v278 = vpop.permute.xlu0 %277
    %v280 = vsel %vm109, %v278, 0.0
    %v281 = vsub.f32 %v275, %v280
    %282 = vset.pattern.permute.xlu0 3
    %283 = vperm.xlu0 %282, %v78
    %v284 = vpop.permute.xlu0 %283
    %v286 = vsel %vm119, %v284, 0.0
    %v287 = vsub.f32 %v281, %v286
    %288 = vset.pattern.permute.xlu0 4
    %289 = vperm.xlu0 %288, %v78
    %v290 = vpop.permute.xlu0 %289
    %v292 = vsel %vm129, %v290, 0.0
    %v293 = vsub.f32 %v287, %v292
    %295 = vset.pattern.permute.xlu0 0
    %296 = vperm.xlu0 %295, %v21
    %v297 = vpop.permute.xlu0 %296
    %v299 = vsub.f32 %v297, %v141
    %v300 = vand.u32 2147483647, %v299
    %v301 = vadd.f32 %v293, %v300
    %302 = vset.pattern.permute.xlu0 1
    %303 = vperm.xlu0 %302, %v21
    %v304 = vpop.permute.xlu0 %303
    %v306 = vsub.f32 %v304, %v149
    %v307 = vand.u32 2147483647, %v306
    %v308 = vadd.f32 %v301, %v307
    %309 = vset.pattern.permute.xlu0 2
    %310 = vperm.xlu0 %309, %v21
    %v311 = vpop.permute.xlu0 %310
    %v313 = vsub.f32 %v311, %v157
    %v314 = vand.u32 2147483647, %v313
    %v315 = vadd.f32 %v308, %v314
    %316 = vset.pattern.permute.xlu0 3
    %317 = vperm.xlu0 %316, %v21
    %v318 = vpop.permute.xlu0 %317
    %v320 = vsub.f32 %v318, %v165
    %v321 = vand.u32 2147483647, %v320
    %v322 = vadd.f32 %v315, %v321
    %v323 = vsel %vm169, 1e+30, %v322
    %vm324 = vcmask 31768
    %v325 = vsel %vm324, %v323, inf
    %326 = vmin.xlane.f32.xlu0 %v325
    %v327 = vpop.xlane.xlu0 %326
    %v328 = vrot.slane %v327, 4
    %v329 = vmin.f32 %v327, %v328
    %v330 = vrot.slane %v329, 2
    %v331 = vmin.f32 %v329, %v330
    %v332 = vrot.slane %v331, 1
    %v333 = vmin.f32 %v331, %v332
    %s334 = vtos %v333
    %v335 = vstv %s334
    %vm336 = vcmp.eq.f32.partialorder %v323, %v335
    %v337 = vsel %vm336, %v83, 8.0
    %v338 = vsel %vm324, %v337, inf
    %339 = vmin.xlane.f32.xlu0 %v338
    %v340 = vpop.xlane.xlu0 %339
    %v341 = vrot.slane %v340, 4
    %v342 = vmin.f32 %v340, %v341
    %v343 = vrot.slane %v342, 2
    %v344 = vmin.f32 %v342, %v343
    %v345 = vrot.slane %v344, 1
    %v346 = vmin.f32 %v344, %v345
    %s347 = vtos %v346
    %s348 = scvt.f32.s32.to.zero.pseudo %s347
    %v349 = vstv %s348
    %vm350 = vcmp.eq.s32.totalorder %v82, %v349
    %v351 = vsel %vm350, 1.0, 0.0
    %vm352 = vcmp.eq.s32.totalorder %v80, 3
    %s353 = sadd.s32 %s348, 8
    %v354 = vstv %s353
    %v355 = vsel %vm352, %v354, %v262
    %vm356 = vcmp.gt.f32.partialorder %v351, 0.0
    %v357 = vsel %vm356, 1e+30, %v322
    %vm358 = vcmask 39968
    %v359 = vsel %vm358, %v357, inf
    %360 = vmin.xlane.f32.xlu0 %v359
    %v361 = vpop.xlane.xlu0 %360
    %v362 = vrot.slane %v361, 4
    %v363 = vmin.f32 %v361, %v362
    %v364 = vrot.slane %v363, 2
    %v365 = vmin.f32 %v363, %v364
    %v366 = vrot.slane %v365, 1
    %v367 = vmin.f32 %v365, %v366
    %s368 = vtos %v367
    %v369 = vstv %s368
    %vm370 = vcmp.eq.f32.partialorder %v357, %v369
    %v371 = vsel %vm370, %v83, 8.0
    %v372 = vsel %vm358, %v371, inf
    %373 = vmin.xlane.f32.xlu0 %v372
    %v374 = vpop.xlane.xlu0 %373
    %v375 = vrot.slane %v374, 4
    %v376 = vmin.f32 %v374, %v375
    %v377 = vrot.slane %v376, 2
    %v378 = vmin.f32 %v376, %v377
    %v379 = vrot.slane %v378, 1
    %v380 = vmin.f32 %v378, %v379
    %s381 = vtos %v380
    %s382 = scvt.f32.s32.to.zero.pseudo %s381
    %v383 = vstv %s382
    %vm384 = vcmp.eq.s32.totalorder %v82, %v383
    %v385 = vsel %vm384, 1.0, %v351
    %vm386 = vcmp.eq.s32.totalorder %v80, 4
    %s387 = sadd.s32 %s382, 8
    %v388 = vstv %s387
    %v389 = vsel %vm386, %v388, %v355
    %vm390 = vcmp.gt.f32.partialorder %v385, 0.0
    %v391 = vsel %vm390, 1e+30, %v322
    %vm392 = vcmask 48168
    %v393 = vsel %vm392, %v391, inf
    %394 = vmin.xlane.f32.xlu0 %v393
    %v395 = vpop.xlane.xlu0 %394
    %v396 = vrot.slane %v395, 4
    %v397 = vmin.f32 %v395, %v396
    %v398 = vrot.slane %v397, 2
    %v399 = vmin.f32 %v397, %v398
    %v400 = vrot.slane %v399, 1
    %v401 = vmin.f32 %v399, %v400
    %s402 = vtos %v401
    %v403 = vstv %s402
    %vm404 = vcmp.eq.f32.partialorder %v391, %v403
    %v405 = vsel %vm404, %v83, 8.0
    %v406 = vsel %vm392, %v405, inf
    %407 = vmin.xlane.f32.xlu0 %v406
    %v408 = vpop.xlane.xlu0 %407
    %v409 = vrot.slane %v408, 4
    %v410 = vmin.f32 %v408, %v409
    %v411 = vrot.slane %v410, 2
    %v412 = vmin.f32 %v410, %v411
    %v413 = vrot.slane %v412, 1
    %v414 = vmin.f32 %v412, %v413
    %s415 = vtos %v414
    %s416 = scvt.f32.s32.to.zero.pseudo %s415
    %vm417 = vcmp.eq.s32.totalorder %v80, 5
    %s418 = sadd.s32 %s416, 8
    %v419 = vstv %s418
    %v420 = vsel %vm417, %v419, %v389
    %v421 = vadd.s32 %v82, 8
    %vm422 = vcmp.eq.s32.totalorder %v82, %v420
    %vm423 = vcmp.eq.s32.totalorder %v421, %v420
    %v425 = vperm.slane %v84, 0
    %v427 = vsel %vm422, %v425, -1.0
    %v428 = vsel %vm423, %v425, -1.0
    %vm429 = vcmask 48128
    %v430 = vsel %vm429, %v427, -inf
    %431 = vmax.xlane.f32.xlu0 %v430
    %v432 = vpop.xlane.xlu0 %431
    %v433 = vsel %vm429, %v428, -inf
    %434 = vmax.xlane.f32.xlu0 %v433
    %v435 = vpop.xlane.xlu0 %434
    %vm436 = vcmp.ge.f32.partialorder %v432, 0.0
    %vm437 = vcmp.ge.f32.partialorder %v435, 0.0
    %v438 = vcvt.f32.s32.to.zero.pseudo %v432
    %v439 = vcvt.f32.s32.to.zero.pseudo %v435
    %v440 = vsel %vm436, %v438, 4
    %v441 = vsel %vm437, %v439, 4
    %vm442 = vcmp.eq.s32.totalorder %v80, %v440
    %vm443 = vcmp.eq.s32.totalorder %v80, %v441
    %v444 = vsel %vm442, %v47, 0.0
    %v445 = vsel %vm443, %v48, 0.0
    %v446 = vsel %vm24, %v444, 0.0
    %447 = vadd.xlane.f32.xlu0 %v446
    %v448 = vpop.xlane.xlu0 %447
    %v449 = vsel %vm24, %v445, 0.0
    %450 = vadd.xlane.f32.xlu0 %v449
    %v451 = vpop.xlane.xlu0 %450
    %v452 = vsub.f32 0.0, %v448
    %v453 = vsub.f32 0.0, %v451
    %vm454 = vcmp.eq.s32.totalorder %v440, 4
    %vm455 = vcmp.eq.s32.totalorder %v441, 4
    %v456 = vsel %vm454, 0.1, 1.0
    %v457 = vsel %vm455, 0.1, 1.0
    %v458 = vmul.f32 %v452, %v456
    %v459 = vmul.f32 %v453, %v457
    %v460 = vsel %vm171, %v458, 0.0
    %v461 = vsel %vm171, %v459, 0.0
    %v462 = vadd.f32 %v460, %v461
    %463 = vadd.xlane.f32.xlu0 %v462
    %v464 = vpop.xlane.xlu0 %463
    %v465 = vrot.slane %v464, 4
    %v466 = vadd.f32 %v464, %v465
    %v467 = vrot.slane %v466, 2
    %v468 = vadd.f32 %v466, %v467
    %v469 = vrot.slane %v468, 1
    %v470 = vadd.f32 %v468, %v469
    %s471 = vtos %v470
    %v472 = vsel %vm171, %v456, 0.0
    %v473 = vsel %vm171, %v457, 0.0
    %v474 = vadd.f32 %v472, %v473
    %475 = vadd.xlane.f32.xlu0 %v474
    %v476 = vpop.xlane.xlu0 %475
    %v477 = vrot.slane %v476, 4
    %v478 = vadd.f32 %v476, %v477
    %v479 = vrot.slane %v478, 2
    %v480 = vadd.f32 %v478, %v479
    %v481 = vrot.slane %v480, 1
    %v482 = vadd.f32 %v480, %v481
    %s483 = vtos %v482
    %v484 = vstv %s483
    %v485 = vrcp.pop %v484
    %v486 = vmul.f32 %v484, %v485
    %v487 = vsub.f32 1.0, %v486
    %v488 = vmul.f32 %v485, %v487
    %v489 = vadd.f32 %v485, %v488
    %vm490 = vweird.f32 %v484
    %vm491 = vweird.f32 %v485
    %vm492 = vmor %vm490, %vm491
    %v493 = vsel %vm492, %v485, %v489
    %v494 = vand.u32 2147483647, %v484
    %vm495 = vcmp.eq.f32.partialorder %v494, 8.507059e+37
    %v496 = vand.u32 %v484, 2147483648
    %v497 = vor.u32 1.1754944e-38, %v496
    %v498 = vsel %vm495, %v497, %v493
    %s499 = vtos %v498
    %s500 = smul.f32 %s471, %s499
    %v501 = vsel %vm422, 1, 0
    %v502 = vsel %vm423, 1, 0
    %v503 = vcvt.s32.f32 %v501
    %v504 = vcvt.s32.f32 %v502
    %v505 = vmul.f32 %v139, %v503
    %v506 = vmul.f32 %v297, %v504
    %v507 = vsel %vm429, %v505, 0.0
    %v508 = vsel %vm429, %v506, 0.0
    %v509 = vadd.f32 %v507, %v508
    %v510 = vrot.slane %v509, 4
    %v511 = vadd.f32 %v509, %v510
    %v512 = vrot.slane %v511, 2
    %v513 = vadd.f32 %v511, %v512
    %v514 = vrot.slane %v513, 1
    %v515 = vadd.f32 %v513, %v514
    %v516 = vmul.f32 %v147, %v503
    %v517 = vmul.f32 %v304, %v504
    %v518 = vsel %vm429, %v516, 0.0
    %v519 = vsel %vm429, %v517, 0.0
    %v520 = vadd.f32 %v518, %v519
    %v521 = vrot.slane %v520, 4
    %v522 = vadd.f32 %v520, %v521
    %v523 = vrot.slane %v522, 2
    %v524 = vadd.f32 %v522, %v523
    %v525 = vrot.slane %v524, 1
    %v526 = vadd.f32 %v524, %v525
    %v527 = vmul.f32 %v155, %v503
    %v528 = vmul.f32 %v311, %v504
    %v529 = vsel %vm429, %v527, 0.0
    %v530 = vsel %vm429, %v528, 0.0
    %v531 = vadd.f32 %v529, %v530
    %v532 = vrot.slane %v531, 4
    %v533 = vadd.f32 %v531, %v532
    %v534 = vrot.slane %v533, 2
    %v535 = vadd.f32 %v533, %v534
    %v536 = vrot.slane %v535, 1
    %v537 = vadd.f32 %v535, %v536
    %v538 = vmul.f32 %v163, %v503
    %v539 = vmul.f32 %v318, %v504
    %v540 = vsel %vm429, %v538, 0.0
    %v541 = vsel %vm429, %v539, 0.0
    %v542 = vadd.f32 %v540, %v541
    %v543 = vrot.slane %v542, 4
    %v544 = vadd.f32 %v542, %v543
    %v545 = vrot.slane %v544, 2
    %v546 = vadd.f32 %v544, %v545
    %v547 = vrot.slane %v546, 1
    %v548 = vadd.f32 %v546, %v547
    %v549 = vsub.f32 %v515, %v23
    %v550 = vand.u32 2147483647, %v549
    %vm551 = vcmask 40960
    %v552 = vsel %vm551, %v550, 0.0
    %553 = vadd.xlane.f32.xlu0 %v552
    %v554 = vpop.xlane.xlu0 %553
    %v555 = vrot.slane %v554, 4
    %v556 = vadd.f32 %v554, %v555
    %v557 = vrot.slane %v556, 2
    %v558 = vadd.f32 %v556, %v557
    %v559 = vrot.slane %v558, 1
    %v560 = vadd.f32 %v558, %v559
    %s561 = vtos %v560
    %v562 = vsub.f32 %v526, %v23
    %v563 = vand.u32 2147483647, %v562
    %v565 = vrot.slane %v563, 1
    %v567 = vsel %vm551, %v565, 0.0
    %568 = vadd.xlane.f32.xlu0 %v567
    %v569 = vpop.xlane.xlu0 %568
    %v570 = vrot.slane %v569, 4
    %v571 = vadd.f32 %v569, %v570
    %v572 = vrot.slane %v571, 2
    %v573 = vadd.f32 %v571, %v572
    %v574 = vrot.slane %v573, 1
    %v575 = vadd.f32 %v573, %v574
    %s576 = vtos %v575
    %s577 = sadd.f32 %s561, %s576
    %v578 = vsub.f32 %v537, %v23
    %v579 = vand.u32 2147483647, %v578
    %v581 = vrot.slane %v579, 2
    %v583 = vsel %vm551, %v581, 0.0
    %584 = vadd.xlane.f32.xlu0 %v583
    %v585 = vpop.xlane.xlu0 %584
    %v586 = vrot.slane %v585, 4
    %v587 = vadd.f32 %v585, %v586
    %v588 = vrot.slane %v587, 2
    %v589 = vadd.f32 %v587, %v588
    %v590 = vrot.slane %v589, 1
    %v591 = vadd.f32 %v589, %v590
    %s592 = vtos %v591
    %s593 = sadd.f32 %s577, %s592
    %v594 = vsub.f32 %v548, %v23
    %v595 = vand.u32 2147483647, %v594
    %v597 = vrot.slane %v595, 3
    %v599 = vsel %vm551, %v597, 0.0
    %600 = vadd.xlane.f32.xlu0 %v599
    %v601 = vpop.xlane.xlu0 %600
    %v602 = vrot.slane %v601, 4
    %v603 = vadd.f32 %v601, %v602
    %v604 = vrot.slane %v603, 2
    %v605 = vadd.f32 %v603, %v604
    %v606 = vrot.slane %v605, 1
    %v607 = vadd.f32 %v605, %v606
    %s608 = vtos %v607
    %s609 = sadd.f32 %s593, %s608
    %v610 = vrcp.pop 24.0
    %v611 = vmul.f32 24.0, %v610
    %v612 = vsub.f32 1.0, %v611
    %v613 = vmul.f32 %v610, %v612
    %v614 = vadd.f32 %v610, %v613
    %vm615 = vweird.f32 %v610
    %v616 = vsel %vm615, %v610, %v614
    %s617 = vtos %v616
    %s618 = smul.f32 %s609, %s617
    %v619 = vmul.f32 %v537, 0.5
    %v620 = vsub.f32 %v515, %v619
    %v621 = vmul.f32 %v548, 0.5
    %v622 = vsub.f32 %v526, %v621
    %v623 = vadd.f32 %v515, %v619
    %v624 = vadd.f32 %v526, %v621
    %v625 = vmul.f32 %v23, 0.5
    %v627 = vrot.slane %v625, 2
    %v629 = vsub.f32 %v23, %v627
    %v630 = vadd.f32 %v23, %v627
    %v631 = vsub.f32 %v623, %v620
    %v632 = vsub.f32 %v624, %v622
    %v633 = vmul.f32 %v631, %v632
    %v634 = vsub.f32 %v630, %v629
    %v636 = vrot.slane %v634, 1
    %v638 = vmul.f32 %v634, %v636
    %v639 = vmax.f32 %v620, %v629
    %v640 = vmax.f32 %v622, %v629
    %v641 = vmin.f32 %v623, %v630
    %v642 = vmin.f32 %v624, %v630
    %v643 = vsub.f32 %v641, %v639
    %v644 = vmax.f32 %v643, 0.0
    %v645 = vsub.f32 %v642, %v640
    %v646 = vmax.f32 %v645, 0.0
    %v648 = vrot.slane %v646, 1
    %v650 = vmul.f32 %v644, %v648
    %v651 = vadd.f32 %v633, %v638
    %v652 = vsub.f32 %v651, %v650
    %v653 = vadd.f32 %v652, 1e-07
    %v654 = vrcp.pop %v653
    %v655 = vmul.f32 %v653, %v654
    %v656 = vsub.f32 1.0, %v655
    %v657 = vmul.f32 %v654, %v656
    %v658 = vadd.f32 %v654, %v657
    %vm659 = vweird.f32 %v653
    %vm660 = vweird.f32 %v654
    %vm661 = vmor %vm659, %vm660
    %v662 = vsel %vm661, %v654, %v658
    %v663 = vand.u32 2147483647, %v653
    %vm664 = vcmp.eq.f32.partialorder %v663, 8.507059e+37
    %v665 = vand.u32 %v653, 2147483648
    %v666 = vor.u32 1.1754944e-38, %v665
    %v667 = vsel %vm664, %v666, %v662
    %v668 = vmul.f32 %v650, %v667
    %v669 = vmin.f32 %v620, %v629
    %v670 = vmin.f32 %v622, %v629
    %v671 = vmax.f32 %v623, %v630
    %v672 = vmax.f32 %v624, %v630
    %v673 = vsub.f32 %v671, %v669
    %v674 = vsub.f32 %v672, %v670
    %v676 = vrot.slane %v674, 1
    %v678 = vmul.f32 %v673, %v676
    %v679 = vsub.f32 %v678, %v652
    %v680 = vadd.f32 %v678, 1e-07
    %v681 = vrcp.pop %v680
    %v682 = vmul.f32 %v680, %v681
    %v683 = vsub.f32 1.0, %v682
    %v684 = vmul.f32 %v681, %v683
    %v685 = vadd.f32 %v681, %v684
    %vm686 = vweird.f32 %v680
    %vm687 = vweird.f32 %v681
    %vm688 = vmor %vm686, %vm687
    %v689 = vsel %vm688, %v681, %v685
    %v690 = vand.u32 2147483647, %v680
    %vm691 = vcmp.eq.f32.partialorder %v690, 8.507059e+37
    %v692 = vand.u32 %v680, 2147483648
    %v693 = vor.u32 1.1754944e-38, %v692
    %v694 = vsel %vm691, %v693, %v689
    %v695 = vmul.f32 %v679, %v694
    %v696 = vsub.f32 %v668, %v695
    %v697 = vsub.f32 1.0, %v696
    %v698 = vsel %vm551, %v697, 0.0
    %699 = vadd.xlane.f32.xlu0 %v698
    %v700 = vpop.xlane.xlu0 %699
    %v701 = vrot.slane %v700, 4
    %v702 = vadd.f32 %v700, %v701
    %v703 = vrot.slane %v702, 2
    %v704 = vadd.f32 %v702, %v703
    %v705 = vrot.slane %v704, 1
    %v706 = vadd.f32 %v704, %v705
    %s707 = vtos %v706
    %v708 = vrcp.pop 6.0
    %v709 = vmul.f32 6.0, %v708
    %v710 = vsub.f32 1.0, %v709
    %v711 = vmul.f32 %v708, %v710
    %v712 = vadd.f32 %v708, %v711
    %vm713 = vweird.f32 %v708
    %v714 = vsel %vm713, %v708, %v712
    %s715 = vtos %v714
    %s716 = smul.f32 %s707, %s715
    %s717 = sadd.f32 %s500, %s618
    %s718 = sadd.f32 %s717, %s716
    %v719 = vstv %s718
    %vm720 = vcmask 0
    %721 = vst.msk [vmem:[#allocation2] sm:$0x1] %vm720, %v719
    // Predicated region
    $region18: #{set_criterion_forward.1} parent=1 // pred_check
      _
    $region19: #{set_criterion_forward.1} parent=1 // pred_check_branch
      %723 = sbr.rel (0) target = $region21
    $region20: #{set_criterion_forward.1} parent=1 // pred_region
      %725 = vsyncadd [#allocation3], 0
      %s727 = sshll.u32 [#allocation2], 4
      %s728 = int_to_ptr.vmem [resolvable:$true] %s727
      %s729 = sshll.u32 %s4, 4
      %s730 = int_to_ptr.hbm [resolvable:$true] %s729
      %732 = dma.vmem_to_hbm [thread:$0]  %s728, 16, %s730, [#allocation3]
    $region21: #{set_criterion_forward.1} parent=1 // pred_fallthru
      _
    // Predicated region
    $region22: #{set_criterion_forward.1} parent=1 // pred_check
      _
    $region23: #{set_criterion_forward.1} parent=1 // pred_check_branch
      %734 = sbr.rel (0) target = $region25
    $region24: #{set_criterion_forward.1} parent=1 // pred_region
      %736 = dma.done [#allocation3], 16
    $region25: #{set_criterion_forward.1} parent=1 // pred_fallthru
      _
    %737 = vsyncpa [#allocation3], 1

</llo_original>
